<compile_context>
chip_gen: v7x
topology: tpu7x:2x2x1
jax: 0.10.0
libtpu: 0.0.40
codegen_flags: <defaults>
</compile_context>

<pallas_src>
import math

import jax
import jax.numpy as jnp
from jax.experimental import pallas as pl
from jax.experimental.pallas import tpu as pltpu

# ----------------------------- model config (small, synthetic) -----------------------------
D_MODEL = 32
NHEADS = 4
HEAD_DIM = D_MODEL // NHEADS
DIM_FF = 64
SEQ_Q = 8      # target sequence length  (L)
SEQ_KV = 8     # source sequence length  (S)
BATCH = 2      # N
EPS = 1e-5

LN_ROWS = SEQ_Q * BATCH     # 16 query rows, ordered (l, n)
SN_ROWS = SEQ_KV * BATCH    # 16 key/value rows, ordered (s, m)

# -------- parameter-slab row layout: ONE (PAR_ROWS, 128) f32 slab, sliced by rows ----------
ROW_WQ, ROW_WK, ROW_WV, ROW_WO = 0, 32, 64, 96          # (32, 32) each; Wq pre-scaled
ROW_W1, ROW_W2 = 128, 160                               # (32, 64) and (64, 32)
ROW_BQ, ROW_BK, ROW_BV, ROW_BO = 224, 225, 226, 227     # (1, 32) each; bq pre-scaled
ROW_B1, ROW_B2 = 228, 229                               # (1, 64), (1, 32)
ROW_G1, ROW_BE1, ROW_G2, ROW_BE2 = 230, 231, 232, 233   # (1, 32) each
ROW_MASK = 240                                          # (16, 16) additive cross-batch mask
PAR_ROWS, PAR_LANES = 256, 128


# ----------------------------------- Pallas kernel body ------------------------------------
def crossformer_kernel(act_ref, par_ref, out_ref):
    """act_ref: ((2L+2S)*N, E) rows = [src; q; k; v], each block in (t, n) row order.
       par_ref: (PAR_ROWS, 128) packed parameter slab (see row-layout constants above).
       out_ref: (L*N, E) output rows in (l, n) order."""
    f32 = jnp.float32
    E, F, H, HD = D_MODEL, DIM_FF, NHEADS, HEAD_DIM
    LN, SN = LN_ROWS, SN_ROWS

    # ---- activations: plain sublane-row slices of the single input slab (no relayout) ----
    src = act_ref[0:LN, :]
    q = act_ref[LN:2 * LN, :]
    k = act_ref[2 * LN:2 * LN + SN, :]
    v = act_ref[2 * LN + SN:2 * LN + 2 * SN, :]

    # ---- parameters: row-range + prefix-lane slices of the packed slab ----
    wq = par_ref[ROW_WQ:ROW_WQ + E, 0:E]      # carries 1/sqrt(head_dim)
    wk = par_ref[ROW_WK:ROW_WK + E, 0:E]
    wv = par_ref[ROW_WV:ROW_WV + E, 0:E]
    wo = par_ref[ROW_WO:ROW_WO + E, 0:E]
    w1 = par_ref[ROW_W1:ROW_W1 + E, 0:F]
    w2 = par_ref[ROW_W2:ROW_W2 + F, 0:E]
    bq = par_ref[ROW_BQ:ROW_BQ + 1, 0:E]      # carries 1/sqrt(head_dim)
    bk = par_ref[ROW_BK:ROW_BK + 1, 0:E]
    bv = par_ref[ROW_BV:ROW_BV + 1, 0:E]
    bo = par_ref[ROW_BO:ROW_BO + 1, 0:E]
    b1 = par_ref[ROW_B1:ROW_B1 + 1, 0:F]
    b2 = par_ref[ROW_B2:ROW_B2 + 1, 0:E]
    g1 = par_ref[ROW_G1:ROW_G1 + 1, 0:E]
    be1 = par_ref[ROW_BE1:ROW_BE1 + 1, 0:E]
    g2 = par_ref[ROW_G2:ROW_G2 + 1, 0:E]
    be2 = par_ref[ROW_BE2:ROW_BE2 + 1, 0:E]
    neg = par_ref[ROW_MASK:ROW_MASK + LN, 0:SN]   # (LN, SN): 0 same-batch, -1e30 cross-batch

    # ---- Q/K/V in-projections: three direct MXU dots (no fused QKV / diagonal extract) ----
    qp = jnp.dot(q, wq, preferred_element_type=f32) + bq
    kp = jnp.dot(k, wk, preferred_element_type=f32) + bk
    vp = jnp.dot(v, wv, preferred_element_type=f32) + bv

    # ---- attention, unrolled over heads as 2D dots; cross-batch terms killed by `neg` ----
    heads = []
    for h in range(H):
        qh = qp[:, h * HD:(h + 1) * HD]                               # (LN, HD)
        kh = kp[:, h * HD:(h + 1) * HD]                               # (SN, HD)
        vh = vp[:, h * HD:(h + 1) * HD]                               # (SN, HD)
        s = jnp.dot(qh, kh.T, preferred_element_type=f32) + neg      # (LN, SN)
        s = s - jnp.max(s, axis=-1, keepdims=True)
        p = jnp.exp(s)
        p = p / jnp.sum(p, axis=-1, keepdims=True)                   # exact divide
        heads.append(jnp.dot(p, vh, preferred_element_type=f32))     # (LN, HD)
    attn_rows = jnp.concatenate(heads, axis=-1)                      # (LN, E)

    attn = jnp.dot(attn_rows, wo, preferred_element_type=f32) + bo

    def layernorm(x, g, b):
        mu = jnp.mean(x, axis=-1, keepdims=True)
        d = x - mu
        var = jnp.mean(d * d, axis=-1, keepdims=True)
        return d * jax.lax.rsqrt(var + EPS) * g + b

    # ---- residual + LN1, FFN (Linear -> ReLU -> Linear), residual + LN2 ----
    x1 = layernorm(src + attn, g1, be1)
    h1 = jnp.maximum(jnp.dot(x1, w1, preferred_element_type=f32) + b1, 0.0)
    ff = jnp.dot(h1, w2, preferred_element_type=f32) + b2
    y = layernorm(x1 + ff, g2, be2)                                  # (LN, E), rows (l, n)

    out_ref[...] = y.astype(out_ref.dtype)


# -------------------------------------- wrapper / call -------------------------------------
def pack_params(p):
    """Host-side, one-time packing: 16 parameter arrays + the constant attention mask
    -> one (PAR_ROWS, 128) f32 slab (single parameter DMA per call)."""
    scale = 1.0 / math.sqrt(HEAD_DIM)
    slab = jnp.zeros((PAR_ROWS, PAR_LANES), jnp.float32)

    def put(s, r0, arr):
        rr, cc = arr.shape
        return s.at[r0:r0 + rr, 0:cc].set(arr.astype(jnp.float32))

    slab = put(slab, ROW_WQ, p["wq"] * scale)   # fold 1/sqrt(head_dim) into Wq / bq
    slab = put(slab, ROW_WK, p["wk"])
    slab = put(slab, ROW_WV, p["wv"])
    slab = put(slab, ROW_WO, p["wo"])
    slab = put(slab, ROW_W1, p["w1"])
    slab = put(slab, ROW_W2, p["w2"])
    slab = put(slab, ROW_BQ, p["bq"] * scale)
    slab = put(slab, ROW_BK, p["bk"])
    slab = put(slab, ROW_BV, p["bv"])
    slab = put(slab, ROW_BO, p["bo"])
    slab = put(slab, ROW_B1, p["b1"])
    slab = put(slab, ROW_B2, p["b2"])
    slab = put(slab, ROW_G1, p["g1"])
    slab = put(slab, ROW_BE1, p["be1"])
    slab = put(slab, ROW_G2, p["g2"])
    slab = put(slab, ROW_BE2, p["be2"])

    # Constant additive attention mask for the row-interleaved (l, n) x (s, m) score matrix:
    # keep same-batch entries (m == n), kill cross-batch entries.
    ri = jnp.arange(LN_ROWS)[:, None] % BATCH
    ci = jnp.arange(SN_ROWS)[None, :] % BATCH
    mask = jnp.where(ri == ci, 0.0, -1e30).astype(jnp.float32)
    slab = put(slab, ROW_MASK, mask)
    return slab


@jax.jit
def crossformer_forward(src, q, k, v, param_slab):
    """src, q: (L, N, E); k, v: (S, N, E)  ->  (L, N, E)   (PyTorch seq-first layout)."""
    L, N, E = src.shape
    S = k.shape[0]

    # Free contiguous reshapes (rows ordered (t, n)) + one concat -> a single activation
    # slab, so the kernel sees exactly two input DMAs (activations + parameter slab).
    acts = jnp.concatenate(
        [src.reshape(L * N, E), q.reshape(L * N, E),
         k.reshape(S * N, E), v.reshape(S * N, E)], axis=0)           # ((2L+2S)*N, E)

    # Single invocation, no grid: the whole working set (~170 KB) is VMEM-resident.
    # NOTE(v7x): only if B*L grows substantially, add a leading "parallel" batch grid axis so
    # the two TensorCores split the batch; at B=2, L=S=8 grid overhead outweighs any split.
    out2 = pl.pallas_call(
        crossformer_kernel,
        out_shape=jax.ShapeDtypeStruct((L * N, E), src.dtype),
        in_specs=[pl.BlockSpec(memory_space=pltpu.MemorySpace.VMEM),
                  pl.BlockSpec(memory_space=pltpu.MemorySpace.VMEM)],
        out_specs=pl.BlockSpec(memory_space=pltpu.MemorySpace.VMEM),
    )(acts, param_slab)

    return out2.reshape(L, N, E)   # free reshape back to seq-first (L, N, E)


# ---------------------------------- pure-JAX reference -------------------------------------
def crossformer_reference(src, q, k, v, params):
    hi = jax.lax.Precision.HIGHEST

    def proj(x, w, b):  # x: (T, N, E); w already transposed (in, out)
        return jnp.einsum("tne,ef->tnf", x, w, precision=hi) + b[0]

    qp = proj(q, params["wq"], params["bq"])
    kp = proj(k, params["wk"], params["bk"])
    vp = proj(v, params["wv"], params["bv"])

    L, N, E = qp.shape
    S = kp.shape[0]
    qh = qp.reshape(L, N, NHEADS, HEAD_DIM)
    kh = kp.reshape(S, N, NHEADS, HEAD_DIM)
    vh = vp.reshape(S, N, NHEADS, HEAD_DIM)
    scores = jnp.einsum("lnhd,snhd->nhls", qh, kh, precision=hi) / math.sqrt(HEAD_DIM)
    p = jax.nn.softmax(scores, axis=-1)
    ah = jnp.einsum("nhls,snhd->lnhd", p, vh, precision=hi).reshape(L, N, E)
    attn = jnp.einsum("lne,ef->lnf", ah, params["wo"], precision=hi) + params["bo"][0]

    def layernorm(x, g, b):
        mu = jnp.mean(x, axis=-1, keepdims=True)
        var = jnp.mean((x - mu) ** 2, axis=-1, keepdims=True)
        return (x - mu) * jax.lax.rsqrt(var + EPS) * g[0] + b[0]

    x = layernorm(src + attn, params["g1"], params["be1"])
    h1 = jax.nn.relu(jnp.einsum("lne,ef->lnf", x, params["w1"], precision=hi)
                     + params["b1"][0])
    ff = jnp.einsum("lnf,fe->lne", h1, params["w2"], precision=hi) + params["b2"][0]
    return layernorm(x + ff, params["g2"], params["be2"])


# ---------------------------------------- main ---------------------------------------------
def init_params(key):
    keys = jax.random.split(key, 16)
    f32 = jnp.float32

    def w(k, shape, scale=0.05):
        return jax.random.normal(k, shape, f32) * scale

    # PyTorch stores in_proj_weight (3E, E) and linear weights as (out, in);
    # we pre-transpose so the kernel does plain x @ W.
    in_proj_w = w(keys[0], (3 * D_MODEL, D_MODEL))
    in_proj_b = w(keys[1], (3 * D_MODEL,))
    wq = in_proj_w[0 * D_MODEL:1 * D_MODEL].T
    wk = in_proj_w[1 * D_MODEL:2 * D_MODEL].T
    wv = in_proj_w[2 * D_MODEL:3 * D_MODEL].T
    bq = in_proj_b[0 * D_MODEL:1 * D_MODEL].reshape(1, D_MODEL)
    bk = in_proj_b[1 * D_MODEL:2 * D_MODEL].reshape(1, D_MODEL)
    bv = in_proj_b[2 * D_MODEL:3 * D_MODEL].reshape(1, D_MODEL)

    wo = w(keys[2], (D_MODEL, D_MODEL)).T
    bo = w(keys[3], (D_MODEL,)).reshape(1, D_MODEL)

    w1 = w(keys[4], (DIM_FF, D_MODEL)).T          # (E, F)
    b1 = w(keys[5], (DIM_FF,)).reshape(1, DIM_FF)
    w2 = w(keys[6], (D_MODEL, DIM_FF)).T          # (F, E)
    b2 = w(keys[7], (D_MODEL,)).reshape(1, D_MODEL)

    g1 = (1.0 + 0.1 * jax.random.normal(keys[8], (D_MODEL,), f32)).reshape(1, D_MODEL)
    be1 = (0.1 * jax.random.normal(keys[9], (D_MODEL,), f32)).reshape(1, D_MODEL)
    g2 = (1.0 + 0.1 * jax.random.normal(keys[10], (D_MODEL,), f32)).reshape(1, D_MODEL)
    be2 = (0.1 * jax.random.normal(keys[11], (D_MODEL,), f32)).reshape(1, D_MODEL)

    return dict(wq=wq, wk=wk, wv=wv, bq=bq, bk=bk, bv=bv, wo=wo, bo=bo,
                w1=w1, b1=b1, w2=w2, b2=b2, g1=g1, be1=be1, g2=g2, be2=be2)


if __name__ == "__main__":
    key = jax.random.PRNGKey(0)
    k_params, k_src, k_q, k_k, k_v = jax.random.split(key, 5)

    params = init_params(k_params)
    param_slab = pack_params(params)   # one-time host-side packing -> single param DMA

    # PyTorch seq-first layout: (L, N, E) for src/q, (S, N, E) for k/v
    src = jax.random.normal(k_src, (SEQ_Q, BATCH, D_MODEL), jnp.float32)
    q = jax.random.normal(k_q, (SEQ_Q, BATCH, D_MODEL), jnp.float32)
    k = jax.random.normal(k_k, (SEQ_KV, BATCH, D_MODEL), jnp.float32)
    v = jax.random.normal(k_v, (SEQ_KV, BATCH, D_MODEL), jnp.float32)

    out = crossformer_forward(src, q, k, v, param_slab)
    out = jax.block_until_ready(out)

    ref = crossformer_reference(src, q, k, v, params)
    ref = jax.block_until_ready(ref)

    assert out.shape == (SEQ_Q, BATCH, D_MODEL), out.shape
    # Softmax now uses an exact divide (per review), so the tolerance is tightened from
    # 5e-3 to 3e-3; the remaining headroom covers the default-precision (bf16-pass) MXU
    # behavior of f32 matmuls inside the kernel, not any kernel-side approximation.
    if not jnp.allclose(out, ref, atol=3e-3, rtol=3e-3):
        err = float(jnp.max(jnp.abs(out - ref)))
        raise AssertionError(f"Pallas kernel output does not match JAX reference (max abs err={err})")

    print("KERNEL_OK")
</pallas_src>

<mosaic_0001>
module attributes {stable_mosaic.version = 11 : i64} {
  func.func @crossformer_kernel(%arg0: memref<64x32xf32, #tpu.memory_space<vmem>>, %arg1: memref<256x128xf32, #tpu.memory_space<vmem>>, %arg2: memref<16x32xf32, #tpu.memory_space<vmem>>) attributes {dimension_semantics = [], scalar_prefetch = 0 : i64, scratch_operands = 0 : i64, tpu.core_type = #tpu.core_type<tc>} {
    %c0 = arith.constant 0 : index
    %c0_0 = arith.constant 0 : index
    %0 = vector.load %arg0[%c0, %c0_0] : memref<64x32xf32, #tpu.memory_space<vmem>>, vector<16x32xf32>
    %c16 = arith.constant 16 : index
    %c0_1 = arith.constant 0 : index
    %1 = vector.load %arg0[%c16, %c0_1] : memref<64x32xf32, #tpu.memory_space<vmem>>, vector<16x32xf32>
    %c32 = arith.constant 32 : index
    %c0_2 = arith.constant 0 : index
    %2 = vector.load %arg0[%c32, %c0_2] : memref<64x32xf32, #tpu.memory_space<vmem>>, vector<16x32xf32>
    %c48 = arith.constant 48 : index
    %c0_3 = arith.constant 0 : index
    %3 = vector.load %arg0[%c48, %c0_3] : memref<64x32xf32, #tpu.memory_space<vmem>>, vector<16x32xf32>
    %c0_4 = arith.constant 0 : index
    %c0_5 = arith.constant 0 : index
    %4 = vector.load %arg1[%c0_4, %c0_5] : memref<256x128xf32, #tpu.memory_space<vmem>>, vector<32x32xf32>
    %c32_6 = arith.constant 32 : index
    %c0_7 = arith.constant 0 : index
    %5 = vector.load %arg1[%c32_6, %c0_7] : memref<256x128xf32, #tpu.memory_space<vmem>>, vector<32x32xf32>
    %c64 = arith.constant 64 : index
    %c0_8 = arith.constant 0 : index
    %6 = vector.load %arg1[%c64, %c0_8] : memref<256x128xf32, #tpu.memory_space<vmem>>, vector<32x32xf32>
    %c96 = arith.constant 96 : index
    %c0_9 = arith.constant 0 : index
    %7 = vector.load %arg1[%c96, %c0_9] : memref<256x128xf32, #tpu.memory_space<vmem>>, vector<32x32xf32>
    %c128 = arith.constant 128 : index
    %c0_10 = arith.constant 0 : index
    %8 = vector.load %arg1[%c128, %c0_10] : memref<256x128xf32, #tpu.memory_space<vmem>>, vector<32x64xf32>
    %c160 = arith.constant 160 : index
    %c0_11 = arith.constant 0 : index
    %9 = vector.load %arg1[%c160, %c0_11] : memref<256x128xf32, #tpu.memory_space<vmem>>, vector<64x32xf32>
    %c224 = arith.constant 224 : index
    %c0_12 = arith.constant 0 : index
    %10 = vector.load %arg1[%c224, %c0_12] : memref<256x128xf32, #tpu.memory_space<vmem>>, vector<1x32xf32>
    %c225 = arith.constant 225 : index
    %c0_13 = arith.constant 0 : index
    %11 = vector.load %arg1[%c225, %c0_13] : memref<256x128xf32, #tpu.memory_space<vmem>>, vector<1x32xf32>
    %c226 = arith.constant 226 : index
    %c0_14 = arith.constant 0 : index
    %12 = vector.load %arg1[%c226, %c0_14] : memref<256x128xf32, #tpu.memory_space<vmem>>, vector<1x32xf32>
    %c227 = arith.constant 227 : index
    %c0_15 = arith.constant 0 : index
    %13 = vector.load %arg1[%c227, %c0_15] : memref<256x128xf32, #tpu.memory_space<vmem>>, vector<1x32xf32>
    %c228 = arith.constant 228 : index
    %c0_16 = arith.constant 0 : index
    %14 = vector.load %arg1[%c228, %c0_16] : memref<256x128xf32, #tpu.memory_space<vmem>>, vector<1x64xf32>
    %c229 = arith.constant 229 : index
    %c0_17 = arith.constant 0 : index
    %15 = vector.load %arg1[%c229, %c0_17] : memref<256x128xf32, #tpu.memory_space<vmem>>, vector<1x32xf32>
    %c230 = arith.constant 230 : index
    %c0_18 = arith.constant 0 : index
    %16 = vector.load %arg1[%c230, %c0_18] : memref<256x128xf32, #tpu.memory_space<vmem>>, vector<1x32xf32>
    %c231 = arith.constant 231 : index
    %c0_19 = arith.constant 0 : index
    %17 = vector.load %arg1[%c231, %c0_19] : memref<256x128xf32, #tpu.memory_space<vmem>>, vector<1x32xf32>
    %c232 = arith.constant 232 : index
    %c0_20 = arith.constant 0 : index
    %18 = vector.load %arg1[%c232, %c0_20] : memref<256x128xf32, #tpu.memory_space<vmem>>, vector<1x32xf32>
    %c233 = arith.constant 233 : index
    %c0_21 = arith.constant 0 : index
    %19 = vector.load %arg1[%c233, %c0_21] : memref<256x128xf32, #tpu.memory_space<vmem>>, vector<1x32xf32>
    %c240 = arith.constant 240 : index
    %c0_22 = arith.constant 0 : index
    %20 = vector.load %arg1[%c240, %c0_22] : memref<256x128xf32, #tpu.memory_space<vmem>>, vector<16x16xf32>
    %cst = arith.constant dense<0.000000e+00> : vector<16x32xf32>
    %21 = tpu.matmul %1, %4, %cst {dimension_numbers = #tpu.dot_dimension_numbers<[1], [0], [0], [1], [0, 0, 1, 1], [], []>} : vector<16x32xf32>, vector<32x32xf32>, vector<16x32xf32> -> vector<16x32xf32>
    %22 = vector.broadcast %10 : vector<1x32xf32> to vector<16x32xf32>
    %23 = arith.addf %21, %22 : vector<16x32xf32>
    %cst_23 = arith.constant dense<0.000000e+00> : vector<16x32xf32>
    %24 = tpu.matmul %2, %5, %cst_23 {dimension_numbers = #tpu.dot_dimension_numbers<[1], [0], [0], [1], [0, 0, 1, 1], [], []>} : vector<16x32xf32>, vector<32x32xf32>, vector<16x32xf32> -> vector<16x32xf32>
    %25 = vector.broadcast %11 : vector<1x32xf32> to vector<16x32xf32>
    %26 = arith.addf %24, %25 : vector<16x32xf32>
    %cst_24 = arith.constant dense<0.000000e+00> : vector<16x32xf32>
    %27 = tpu.matmul %3, %6, %cst_24 {dimension_numbers = #tpu.dot_dimension_numbers<[1], [0], [0], [1], [0, 0, 1, 1], [], []>} : vector<16x32xf32>, vector<32x32xf32>, vector<16x32xf32> -> vector<16x32xf32>
    %28 = vector.broadcast %12 : vector<1x32xf32> to vector<16x32xf32>
    %29 = arith.addf %27, %28 : vector<16x32xf32>
    %30 = vector.extract_strided_slice %23 {offsets = [0, 0], sizes = [16, 8], strides = [1, 1]} : vector<16x32xf32> to vector<16x8xf32>
    %31 = vector.extract_strided_slice %26 {offsets = [0, 0], sizes = [16, 8], strides = [1, 1]} : vector<16x32xf32> to vector<16x8xf32>
    %32 = vector.extract_strided_slice %29 {offsets = [0, 0], sizes = [16, 8], strides = [1, 1]} : vector<16x32xf32> to vector<16x8xf32>
    %33 = tpu.transpose %31, [1, 0] : vector<16x8xf32> -> vector<8x16xf32>
    %cst_25 = arith.constant dense<0.000000e+00> : vector<16x16xf32>
    %34 = tpu.matmul %30, %33, %cst_25 {dimension_numbers = #tpu.dot_dimension_numbers<[1], [0], [0], [1], [0, 0, 1, 1], [], []>} : vector<16x8xf32>, vector<8x16xf32>, vector<16x16xf32> -> vector<16x16xf32>
    %35 = arith.addf %34, %20 : vector<16x16xf32>
    %cst_26 = arith.constant dense<0xFF800000> : vector<16xf32>
    %36 = vector.multi_reduction <maximumf>, %35, %cst_26 [1] : vector<16x16xf32> to vector<16xf32>
    %37 = vector.shape_cast %36 : vector<16xf32> to vector<16x1xf32>
    %38 = vector.broadcast %37 : vector<16x1xf32> to vector<16x16xf32>
    %39 = arith.subf %35, %38 : vector<16x16xf32>
    %40 = math.exp %39 : vector<16x16xf32>
    %cst_27 = arith.constant dense<0.000000e+00> : vector<16xf32>
    %41 = vector.multi_reduction <add>, %40, %cst_27 [1] : vector<16x16xf32> to vector<16xf32>
    %42 = vector.shape_cast %41 : vector<16xf32> to vector<16x1xf32>
    %43 = vector.broadcast %42 : vector<16x1xf32> to vector<16x16xf32>
    %44 = arith.divf %40, %43 : vector<16x16xf32>
    %cst_28 = arith.constant dense<0.000000e+00> : vector<16x8xf32>
    %45 = tpu.matmul %44, %32, %cst_28 {dimension_numbers = #tpu.dot_dimension_numbers<[1], [0], [0], [1], [0, 0, 1, 1], [], []>} : vector<16x16xf32>, vector<16x8xf32>, vector<16x8xf32> -> vector<16x8xf32>
    %46 = vector.extract_strided_slice %23 {offsets = [0, 8], sizes = [16, 8], strides = [1, 1]} : vector<16x32xf32> to vector<16x8xf32>
    %47 = vector.extract_strided_slice %26 {offsets = [0, 8], sizes = [16, 8], strides = [1, 1]} : vector<16x32xf32> to vector<16x8xf32>
    %48 = vector.extract_strided_slice %29 {offsets = [0, 8], sizes = [16, 8], strides = [1, 1]} : vector<16x32xf32> to vector<16x8xf32>
    %49 = tpu.transpose %47, [1, 0] : vector<16x8xf32> -> vector<8x16xf32>
    %cst_29 = arith.constant dense<0.000000e+00> : vector<16x16xf32>
    %50 = tpu.matmul %46, %49, %cst_29 {dimension_numbers = #tpu.dot_dimension_numbers<[1], [0], [0], [1], [0, 0, 1, 1], [], []>} : vector<16x8xf32>, vector<8x16xf32>, vector<16x16xf32> -> vector<16x16xf32>
    %51 = arith.addf %50, %20 : vector<16x16xf32>
    %cst_30 = arith.constant dense<0xFF800000> : vector<16xf32>
    %52 = vector.multi_reduction <maximumf>, %51, %cst_30 [1] : vector<16x16xf32> to vector<16xf32>
    %53 = vector.shape_cast %52 : vector<16xf32> to vector<16x1xf32>
    %54 = vector.broadcast %53 : vector<16x1xf32> to vector<16x16xf32>
    %55 = arith.subf %51, %54 : vector<16x16xf32>
    %56 = math.exp %55 : vector<16x16xf32>
    %cst_31 = arith.constant dense<0.000000e+00> : vector<16xf32>
    %57 = vector.multi_reduction <add>, %56, %cst_31 [1] : vector<16x16xf32> to vector<16xf32>
    %58 = vector.shape_cast %57 : vector<16xf32> to vector<16x1xf32>
    %59 = vector.broadcast %58 : vector<16x1xf32> to vector<16x16xf32>
    %60 = arith.divf %56, %59 : vector<16x16xf32>
    %cst_32 = arith.constant dense<0.000000e+00> : vector<16x8xf32>
    %61 = tpu.matmul %60, %48, %cst_32 {dimension_numbers = #tpu.dot_dimension_numbers<[1], [0], [0], [1], [0, 0, 1, 1], [], []>} : vector<16x16xf32>, vector<16x8xf32>, vector<16x8xf32> -> vector<16x8xf32>
    %62 = vector.extract_strided_slice %23 {offsets = [0, 16], sizes = [16, 8], strides = [1, 1]} : vector<16x32xf32> to vector<16x8xf32>
    %63 = vector.extract_strided_slice %26 {offsets = [0, 16], sizes = [16, 8], strides = [1, 1]} : vector<16x32xf32> to vector<16x8xf32>
    %64 = vector.extract_strided_slice %29 {offsets = [0, 16], sizes = [16, 8], strides = [1, 1]} : vector<16x32xf32> to vector<16x8xf32>
    %65 = tpu.transpose %63, [1, 0] : vector<16x8xf32> -> vector<8x16xf32>
    %cst_33 = arith.constant dense<0.000000e+00> : vector<16x16xf32>
    %66 = tpu.matmul %62, %65, %cst_33 {dimension_numbers = #tpu.dot_dimension_numbers<[1], [0], [0], [1], [0, 0, 1, 1], [], []>} : vector<16x8xf32>, vector<8x16xf32>, vector<16x16xf32> -> vector<16x16xf32>
    %67 = arith.addf %66, %20 : vector<16x16xf32>
    %cst_34 = arith.constant dense<0xFF800000> : vector<16xf32>
    %68 = vector.multi_reduction <maximumf>, %67, %cst_34 [1] : vector<16x16xf32> to vector<16xf32>
    %69 = vector.shape_cast %68 : vector<16xf32> to vector<16x1xf32>
    %70 = vector.broadcast %69 : vector<16x1xf32> to vector<16x16xf32>
    %71 = arith.subf %67, %70 : vector<16x16xf32>
    %72 = math.exp %71 : vector<16x16xf32>
    %cst_35 = arith.constant dense<0.000000e+00> : vector<16xf32>
    %73 = vector.multi_reduction <add>, %72, %cst_35 [1] : vector<16x16xf32> to vector<16xf32>
    %74 = vector.shape_cast %73 : vector<16xf32> to vector<16x1xf32>
    %75 = vector.broadcast %74 : vector<16x1xf32> to vector<16x16xf32>
    %76 = arith.divf %72, %75 : vector<16x16xf32>
    %cst_36 = arith.constant dense<0.000000e+00> : vector<16x8xf32>
    %77 = tpu.matmul %76, %64, %cst_36 {dimension_numbers = #tpu.dot_dimension_numbers<[1], [0], [0], [1], [0, 0, 1, 1], [], []>} : vector<16x16xf32>, vector<16x8xf32>, vector<16x8xf32> -> vector<16x8xf32>
    %78 = vector.extract_strided_slice %23 {offsets = [0, 24], sizes = [16, 8], strides = [1, 1]} : vector<16x32xf32> to vector<16x8xf32>
    %79 = vector.extract_strided_slice %26 {offsets = [0, 24], sizes = [16, 8], strides = [1, 1]} : vector<16x32xf32> to vector<16x8xf32>
    %80 = vector.extract_strided_slice %29 {offsets = [0, 24], sizes = [16, 8], strides = [1, 1]} : vector<16x32xf32> to vector<16x8xf32>
    %81 = tpu.transpose %79, [1, 0] : vector<16x8xf32> -> vector<8x16xf32>
    %cst_37 = arith.constant dense<0.000000e+00> : vector<16x16xf32>
    %82 = tpu.matmul %78, %81, %cst_37 {dimension_numbers = #tpu.dot_dimension_numbers<[1], [0], [0], [1], [0, 0, 1, 1], [], []>} : vector<16x8xf32>, vector<8x16xf32>, vector<16x16xf32> -> vector<16x16xf32>
    %83 = arith.addf %82, %20 : vector<16x16xf32>
    %cst_38 = arith.constant dense<0xFF800000> : vector<16xf32>
    %84 = vector.multi_reduction <maximumf>, %83, %cst_38 [1] : vector<16x16xf32> to vector<16xf32>
    %85 = vector.shape_cast %84 : vector<16xf32> to vector<16x1xf32>
    %86 = vector.broadcast %85 : vector<16x1xf32> to vector<16x16xf32>
    %87 = arith.subf %83, %86 : vector<16x16xf32>
    %88 = math.exp %87 : vector<16x16xf32>
    %cst_39 = arith.constant dense<0.000000e+00> : vector<16xf32>
    %89 = vector.multi_reduction <add>, %88, %cst_39 [1] : vector<16x16xf32> to vector<16xf32>
    %90 = vector.shape_cast %89 : vector<16xf32> to vector<16x1xf32>
    %91 = vector.broadcast %90 : vector<16x1xf32> to vector<16x16xf32>
    %92 = arith.divf %88, %91 : vector<16x16xf32>
    %cst_40 = arith.constant dense<0.000000e+00> : vector<16x8xf32>
    %93 = tpu.matmul %92, %80, %cst_40 {dimension_numbers = #tpu.dot_dimension_numbers<[1], [0], [0], [1], [0, 0, 1, 1], [], []>} : vector<16x16xf32>, vector<16x8xf32>, vector<16x8xf32> -> vector<16x8xf32>
    %94 = tpu.concatenate %45, %61, %77, %93 in 1 : vector<16x8xf32>, vector<16x8xf32>, vector<16x8xf32>, vector<16x8xf32> -> vector<16x32xf32>
    %cst_41 = arith.constant dense<0.000000e+00> : vector<16x32xf32>
    %95 = tpu.matmul %94, %7, %cst_41 {dimension_numbers = #tpu.dot_dimension_numbers<[1], [0], [0], [1], [0, 0, 1, 1], [], []>} : vector<16x32xf32>, vector<32x32xf32>, vector<16x32xf32> -> vector<16x32xf32>
    %96 = vector.broadcast %13 : vector<1x32xf32> to vector<16x32xf32>
    %97 = arith.addf %95, %96 : vector<16x32xf32>
    %98 = arith.addf %0, %97 : vector<16x32xf32>
    %cst_42 = arith.constant dense<0.000000e+00> : vector<16xf32>
    %99 = vector.multi_reduction <add>, %98, %cst_42 [1] : vector<16x32xf32> to vector<16xf32>
    %100 = vector.shape_cast %99 : vector<16xf32> to vector<16x1xf32>
    %cst_43 = arith.constant 3.200000e+01 : f32
    %101 = vector.broadcast %cst_43 : f32 to vector<16x1xf32>
    %102 = arith.divf %100, %101 : vector<16x1xf32>
    %103 = vector.broadcast %102 : vector<16x1xf32> to vector<16x32xf32>
    %104 = arith.subf %98, %103 : vector<16x32xf32>
    %105 = arith.mulf %104, %104 : vector<16x32xf32>
    %cst_44 = arith.constant dense<0.000000e+00> : vector<16xf32>
    %106 = vector.multi_reduction <add>, %105, %cst_44 [1] : vector<16x32xf32> to vector<16xf32>
    %107 = vector.shape_cast %106 : vector<16xf32> to vector<16x1xf32>
    %cst_45 = arith.constant 3.200000e+01 : f32
    %108 = vector.broadcast %cst_45 : f32 to vector<16x1xf32>
    %109 = arith.divf %107, %108 : vector<16x1xf32>
    %cst_46 = arith.constant 9.99999974E-6 : f32
    %110 = vector.broadcast %cst_46 : f32 to vector<16x1xf32>
    %111 = arith.addf %109, %110 : vector<16x1xf32>
    %112 = math.rsqrt %111 : vector<16x1xf32>
    %113 = vector.broadcast %112 : vector<16x1xf32> to vector<16x32xf32>
    %114 = arith.mulf %104, %113 : vector<16x32xf32>
    %115 = vector.broadcast %16 : vector<1x32xf32> to vector<16x32xf32>
    %116 = arith.mulf %114, %115 : vector<16x32xf32>
    %117 = vector.broadcast %17 : vector<1x32xf32> to vector<16x32xf32>
    %118 = arith.addf %116, %117 : vector<16x32xf32>
    %cst_47 = arith.constant dense<0.000000e+00> : vector<16x64xf32>
    %119 = tpu.matmul %118, %8, %cst_47 {dimension_numbers = #tpu.dot_dimension_numbers<[1], [0], [0], [1], [0, 0, 1, 1], [], []>} : vector<16x32xf32>, vector<32x64xf32>, vector<16x64xf32> -> vector<16x64xf32>
    %120 = vector.broadcast %14 : vector<1x64xf32> to vector<16x64xf32>
    %121 = arith.addf %119, %120 : vector<16x64xf32>
    %cst_48 = arith.constant 0.000000e+00 : f32
    %122 = vector.broadcast %cst_48 : f32 to vector<16x64xf32>
    %123 = arith.maximumf %121, %122 : vector<16x64xf32>
    %cst_49 = arith.constant dense<0.000000e+00> : vector<16x32xf32>
    %124 = tpu.matmul %123, %9, %cst_49 {dimension_numbers = #tpu.dot_dimension_numbers<[1], [0], [0], [1], [0, 0, 1, 1], [], []>} : vector<16x64xf32>, vector<64x32xf32>, vector<16x32xf32> -> vector<16x32xf32>
    %125 = vector.broadcast %15 : vector<1x32xf32> to vector<16x32xf32>
    %126 = arith.addf %124, %125 : vector<16x32xf32>
    %127 = arith.addf %118, %126 : vector<16x32xf32>
    %cst_50 = arith.constant dense<0.000000e+00> : vector<16xf32>
    %128 = vector.multi_reduction <add>, %127, %cst_50 [1] : vector<16x32xf32> to vector<16xf32>
    %129 = vector.shape_cast %128 : vector<16xf32> to vector<16x1xf32>
    %cst_51 = arith.constant 3.200000e+01 : f32
    %130 = vector.broadcast %cst_51 : f32 to vector<16x1xf32>
    %131 = arith.divf %129, %130 : vector<16x1xf32>
    %132 = vector.broadcast %131 : vector<16x1xf32> to vector<16x32xf32>
    %133 = arith.subf %127, %132 : vector<16x32xf32>
    %134 = arith.mulf %133, %133 : vector<16x32xf32>
    %cst_52 = arith.constant dense<0.000000e+00> : vector<16xf32>
    %135 = vector.multi_reduction <add>, %134, %cst_52 [1] : vector<16x32xf32> to vector<16xf32>
    %136 = vector.shape_cast %135 : vector<16xf32> to vector<16x1xf32>
    %cst_53 = arith.constant 3.200000e+01 : f32
    %137 = vector.broadcast %cst_53 : f32 to vector<16x1xf32>
    %138 = arith.divf %136, %137 : vector<16x1xf32>
    %cst_54 = arith.constant 9.99999974E-6 : f32
    %139 = vector.broadcast %cst_54 : f32 to vector<16x1xf32>
    %140 = arith.addf %138, %139 : vector<16x1xf32>
    %141 = math.rsqrt %140 : vector<16x1xf32>
    %142 = vector.broadcast %141 : vector<16x1xf32> to vector<16x32xf32>
    %143 = arith.mulf %133, %142 : vector<16x32xf32>
    %144 = vector.broadcast %18 : vector<1x32xf32> to vector<16x32xf32>
    %145 = arith.mulf %143, %144 : vector<16x32xf32>
    %146 = vector.broadcast %19 : vector<1x32xf32> to vector<16x32xf32>
    %147 = arith.addf %145, %146 : vector<16x32xf32>
    %c0_55 = arith.constant 0 : index
    %c0_56 = arith.constant 0 : index
    %148 = vector.load %arg2[%c0_55, %c0_56] : memref<16x32xf32, #tpu.memory_space<vmem>>, vector<16x32xf32>
    tpu.vector_store %arg2[%c0_55, %c0_56], %147 {strides = array<i32>} : memref<16x32xf32, #tpu.memory_space<vmem>>, vector<16x32xf32>,
    return
  }
}

</mosaic_0001>

<llo_original>
// kernel: crossformer_forward.1
$region0: #{crossformer_forward.1}
  #allocation0 [shape = 'u32[]', space=smem, size = 0x4, offset = 0x4, fixed_abs, tag = 'smem constant byte address 0x4 - core index']
  #allocation1 [shape = 'u32[144,128]{1,0:T(1,128)}', space=vmem, size = 0x12000, scoped, tag = 'internal scratch']
  %s0 = inlined_call_operand.vmem [shape: f32[64,32], index: 0, kind: input, shape index: {}]
  %s1 = inlined_call_operand.hbm [shape: f32[256,128], index: 1, kind: input, shape index: {}]
  %s2 = inlined_call_operand.hbm [shape: f32[16,32], index: 2, kind: output, shape index: {}]
  %s3 = sld [smem:[#allocation0]]
  $region22: #{crossformer_forward.1} parent=0
    _
  %s5 = ssub.s32 1, %s3
  %s6 = scalar_select 0, %s5, %s3
  $region1: #{crossformer_forward.1} parent=0
    #allocation2 [shape = 'u8[131072]{0}', space=vmem, size = 0x20000, scoped, tag = 'input window, operand 1, single buffered']
    #allocation3 [shape = 's32[1]{0}', space=sflag, size = 0x4, scoped, tag = 'scoped memory for crossformer_forward.1']
    #allocation4 [shape = 's32[1]{0}', space=sflag, size = 0x4, scoped, tag = 'scoped memory for crossformer_forward.1']
    #allocation5 [shape = 'u8[8192]{0}', space=vmem, size = 0x2000, scoped, tag = 'output window, operand 0, single buffered']
    %7 = vsyncpa [#allocation3], 0
    %8 = vsyncpa [#allocation4], 0
    // Predicated region
    $region2: #{crossformer_forward.1} parent=1 // pred_check
      _
    $region3: #{crossformer_forward.1} parent=1 // pred_check_branch
      %10 = sbr.rel (0) target = $region5
    $region4: #{crossformer_forward.1} parent=1 // pred_region
      _
    $region5: #{crossformer_forward.1} parent=1 // pred_fallthru
      _
    // Predicated region
    $region6: #{crossformer_forward.1} parent=1 // pred_check
      _
    $region7: #{crossformer_forward.1} parent=1 // pred_check_branch
      %12 = sbr.rel (0) target = $region9
    $region8: #{crossformer_forward.1} parent=1 // pred_region
      %s14 = ssub.s32 4096, 4096
      %15 = vsyncadd [#allocation3], %s14
      %s16 = sshll.u32 [#allocation2], 4
      %s17 = int_to_ptr.vmem [resolvable:$true] %s16
      %22 = dma.hbm_to_vmem [thread:$0]  %s1, 4096, %s17, [#allocation3], 128, 128, 8
    $region9: #{crossformer_forward.1} parent=1 // pred_fallthru
      _
    // Predicated region
    $region10: #{crossformer_forward.1} parent=1 // pred_check
      _
    $region11: #{crossformer_forward.1} parent=1 // pred_check_branch
      %24 = sbr.rel (0) target = $region13
    $region12: #{crossformer_forward.1} parent=1 // pred_region
      %25 = dma.done [#allocation3], 4096
    $region13: #{crossformer_forward.1} parent=1 // pred_fallthru
      _
    %v26 = vld [vmem:[%s0] sm:$0xff]
    %v27 = vld [vmem:[%s0 + $0x8] sm:$0xff]
    %v28 = vld [vmem:[%s0 + $0x10] sm:$0xff]
    %v29 = vld [vmem:[%s0 + $0x18] sm:$0xff]
    %v30 = vld [vmem:[%s0 + $0x20] sm:$0xff]
    %v31 = vld [vmem:[%s0 + $0x28] sm:$0xff]
    %v32 = vld [vmem:[%s0 + $0x30] sm:$0xff]
    %v33 = vld [vmem:[%s0 + $0x38] sm:$0xff]
    %v34 = vld [vmem:[#allocation2] sm:$0xff]
    %v35 = vld [vmem:[#allocation2 + $0x8] sm:$0xff]
    %v36 = vld [vmem:[#allocation2 + $0x10] sm:$0xff]
    %v37 = vld [vmem:[#allocation2 + $0x18] sm:$0xff]
    %v38 = vld [vmem:[#allocation2 + $0x20] sm:$0xff]
    %v39 = vld [vmem:[#allocation2 + $0x28] sm:$0xff]
    %v40 = vld [vmem:[#allocation2 + $0x30] sm:$0xff]
    %v41 = vld [vmem:[#allocation2 + $0x38] sm:$0xff]
    %v42 = vld [vmem:[#allocation2 + $0x40] sm:$0xff]
    %v43 = vld [vmem:[#allocation2 + $0x48] sm:$0xff]
    %v44 = vld [vmem:[#allocation2 + $0x50] sm:$0xff]
    %v45 = vld [vmem:[#allocation2 + $0x58] sm:$0xff]
    %v46 = vld [vmem:[#allocation2 + $0x60] sm:$0xff]
    %v47 = vld [vmem:[#allocation2 + $0x68] sm:$0xff]
    %v48 = vld [vmem:[#allocation2 + $0x70] sm:$0xff]
    %v49 = vld [vmem:[#allocation2 + $0x78] sm:$0xff]
    %v50 = vld [vmem:[#allocation2 + $0x80] sm:$0xff]
    %v51 = vld [vmem:[#allocation2 + $0x88] sm:$0xff]
    %v52 = vld [vmem:[#allocation2 + $0x90] sm:$0xff]
    %v53 = vld [vmem:[#allocation2 + $0x98] sm:$0xff]
    %v54 = vld [vmem:[#allocation2 + $0xa0] sm:$0xff]
    %v55 = vld [vmem:[#allocation2 + $0xa8] sm:$0xff]
    %v56 = vld [vmem:[#allocation2 + $0xb0] sm:$0xff]
    %v57 = vld [vmem:[#allocation2 + $0xb8] sm:$0xff]
    %v58 = vld [vmem:[#allocation2 + $0xc0] sm:$0xff]
    %v59 = vld [vmem:[#allocation2 + $0xc8] sm:$0xff]
    %v60 = vld [vmem:[#allocation2 + $0xd0] sm:$0xff]
    %v61 = vld [vmem:[#allocation2 + $0xd8] sm:$0xff]
    %v62 = vld [vmem:[#allocation2 + $0xe0] sm:$0x1]
    %v63 = vld [vmem:[#allocation2 + $0xe1] sm:$0x1]
    %v64 = vld [vmem:[#allocation2 + $0xe2] sm:$0x1]
    %v65 = vld [vmem:[#allocation2 + $0xe3] sm:$0x1]
    %v66 = vld [vmem:[#allocation2 + $0xe4] sm:$0x1]
    %v67 = vld [vmem:[#allocation2 + $0xe5] sm:$0x1]
    %v68 = vld [vmem:[#allocation2 + $0xe6] sm:$0x1]
    %v69 = vld [vmem:[#allocation2 + $0xe7] sm:$0x1]
    %v70 = vld [vmem:[#allocation2 + $0xe8] sm:$0x1]
    %v71 = vld [vmem:[#allocation2 + $0xe9] sm:$0x1]
    %v72 = vld [vmem:[#allocation2 + $0xf0] sm:$0xff]
    %v73 = vld [vmem:[#allocation2 + $0xf8] sm:$0xff]
    %v74 = vlaneseq
    %v75 = vshrl.u32 %v74, 7
    %v76 = vsub.s32 0, %v75
    %v77 = vrot.slane %v62, %v76
    %vm78 = vcmask 261120
    %v80 = vsel %vm78, %v28, 0
    %v83 = vsel %vm78, %v29, 0
    %85 = vmatprep.subr.mxu0 0.0
    %86 = vmatpush1.msra.mxu0 %v34
    %87 = vmatprep.subr.mxu0 0.0
    %88 = vmatpush1.msra.mxu0 %v35
    %89 = vmatprep.subr.mxu0 0.0
    %90 = vmatpush1.msra.mxu0 %v36
    %91 = vmatprep.subr.mxu0 0.0
    %92 = vmatpush1.msra.mxu0 %v37
    %93 = vmatprep.subr.mxu0 0.0
    %94 = vmatpush1.msra.mxu0 0.0
    %95 = vmatprep.subr.mxu0 0.0
    %96 = vmatpush1.msra.mxu0 0.0
    %97 = vmatprep.subr.mxu0 0.0
    %98 = vmatpush1.msra.mxu0 0.0
    %99 = vmatprep.subr.mxu0 0.0
    %100 = vmatpush1.msra.mxu0 0.0
    %101 = vmatprep.subr.mxu0 0.0
    %102 = vmatpush1.msra.mxu0 0.0
    %103 = vmatprep.subr.mxu0 0.0
    %104 = vmatpush1.msra.mxu0 0.0
    %105 = vmatprep.subr.mxu0 0.0
    %106 = vmatpush1.msra.mxu0 0.0
    %107 = vmatprep.subr.mxu0 0.0
    %108 = vmatpush1.msra.mxu0 0.0
    %109 = vmatprep.subr.mxu0 0.0
    %110 = vmatpush1.msra.mxu0 0.0
    %111 = vmatprep.subr.mxu0 0.0
    %112 = vmatpush1.msra.mxu0 0.0
    %113 = vmatprep.subr.mxu0 0.0
    %114 = vmatpush1.msra.mxu0 0.0
    %115 = vmatprep.subr.mxu0 0.0
    %116 = vmatpush1.msra.mxu0 0.0
    %117 = vmatprep.subr.mxu0 0.0
    %118 = vmatpush1.msra.mxu0 0.0
    %119 = vmatprep.subr.mxu0 0.0
    %120 = vmatpush1.msra.mxu0 0.0
    %121 = vmatprep.subr.mxu0 0.0
    %122 = vmatpush1.msra.mxu0 0.0
    %123 = vmatprep.subr.mxu0 0.0
    %124 = vmatpush1.msra.mxu0 0.0
    %125 = vmatprep.subr.mxu0 0.0
    %126 = vmatpush1.msra.mxu0 0.0
    %127 = vmatprep.subr.mxu0 0.0
    %128 = vmatpush1.msra.mxu0 0.0
    %129 = vmatprep.subr.mxu0 0.0
    %130 = vmatpush1.msra.mxu0 0.0
    %131 = vmatprep.subr.mxu0 0.0
    %132 = vmatpush1.msra.mxu0 0.0
    %133 = vmatprep.subr.mxu0 0.0
    %134 = vmatpush1.msra.mxu0 0.0
    %135 = vmatprep.subr.mxu0 0.0
    %136 = vmatpush1.msra.mxu0 0.0
    %137 = vmatprep.subr.mxu0 0.0
    %138 = vmatpush1.msra.mxu0 0.0
    %139 = vmatprep.subr.mxu0 0.0
    %140 = vmatpush1.msra.mxu0 0.0
    %141 = vmatprep.subr.mxu0 0.0
    %142 = vmatpush1.msra.mxu0 0.0
    %143 = vmatprep.subr.mxu0 0.0
    %144 = vmatpush1.msra.mxu0 0.0
    %145 = vmatprep.subr.mxu0 0.0
    %146 = vmatpush1.msra.mxu0 0.0
    %147 = vmatprep.subr.mxu0 0.0
    %148 = vmatpush1.msra.mxu0 0.0
    %149 = vmatprep.mubr.f32.mxu0 0.0
    %150 = vmatmul.mubr.f32.gmra.mrb[0].mxu0 %v80
    %v151 = vpop.f32.mrb[0].mxu0
    %v152 = vadd.f32 %v77, %v151
    %v153 = vpop.f32.mrb[0].mxu0
    %154 = vmatprep.mubr.f32.mxu0 0.0
    %155 = vmatmul.mubr.f32.gmra.mrb[0].mxu0 %v83
    %v156 = vpop.f32.mrb[0].mxu0
    %v157 = vadd.f32 %v77, %v156
    %v158 = vpop.f32.mrb[0].mxu0
    %159 = vdwg.mxu0
    %v160 = vlaneseq
    %v161 = vshrl.u32 %v160, 7
    %v162 = vsub.s32 0, %v161
    %v163 = vrot.slane %v63, %v162
    %v165 = vsel %vm78, %v30, 0
    %v168 = vsel %vm78, %v31, 0
    %170 = vmatprep.subr.mxu0 0.0
    %171 = vmatpush1.msra.mxu0 %v38
    %172 = vmatprep.subr.mxu0 0.0
    %173 = vmatpush1.msra.mxu0 %v39
    %174 = vmatprep.subr.mxu0 0.0
    %175 = vmatpush1.msra.mxu0 %v40
    %176 = vmatprep.subr.mxu0 0.0
    %177 = vmatpush1.msra.mxu0 %v41
    %178 = vmatprep.subr.mxu0 0.0
    %179 = vmatpush1.msra.mxu0 0.0
    %180 = vmatprep.subr.mxu0 0.0
    %181 = vmatpush1.msra.mxu0 0.0
    %182 = vmatprep.subr.mxu0 0.0
    %183 = vmatpush1.msra.mxu0 0.0
    %184 = vmatprep.subr.mxu0 0.0
    %185 = vmatpush1.msra.mxu0 0.0
    %186 = vmatprep.subr.mxu0 0.0
    %187 = vmatpush1.msra.mxu0 0.0
    %188 = vmatprep.subr.mxu0 0.0
    %189 = vmatpush1.msra.mxu0 0.0
    %190 = vmatprep.subr.mxu0 0.0
    %191 = vmatpush1.msra.mxu0 0.0
    %192 = vmatprep.subr.mxu0 0.0
    %193 = vmatpush1.msra.mxu0 0.0
    %194 = vmatprep.subr.mxu0 0.0
    %195 = vmatpush1.msra.mxu0 0.0
    %196 = vmatprep.subr.mxu0 0.0
    %197 = vmatpush1.msra.mxu0 0.0
    %198 = vmatprep.subr.mxu0 0.0
    %199 = vmatpush1.msra.mxu0 0.0
    %200 = vmatprep.subr.mxu0 0.0
    %201 = vmatpush1.msra.mxu0 0.0
    %202 = vmatprep.subr.mxu0 0.0
    %203 = vmatpush1.msra.mxu0 0.0
    %204 = vmatprep.subr.mxu0 0.0
    %205 = vmatpush1.msra.mxu0 0.0
    %206 = vmatprep.subr.mxu0 0.0
    %207 = vmatpush1.msra.mxu0 0.0
    %208 = vmatprep.subr.mxu0 0.0
    %209 = vmatpush1.msra.mxu0 0.0
    %210 = vmatprep.subr.mxu0 0.0
    %211 = vmatpush1.msra.mxu0 0.0
    %212 = vmatprep.subr.mxu0 0.0
    %213 = vmatpush1.msra.mxu0 0.0
    %214 = vmatprep.subr.mxu0 0.0
    %215 = vmatpush1.msra.mxu0 0.0
    %216 = vmatprep.subr.mxu0 0.0
    %217 = vmatpush1.msra.mxu0 0.0
    %218 = vmatprep.subr.mxu0 0.0
    %219 = vmatpush1.msra.mxu0 0.0
    %220 = vmatprep.subr.mxu0 0.0
    %221 = vmatpush1.msra.mxu0 0.0
    %222 = vmatprep.subr.mxu0 0.0
    %223 = vmatpush1.msra.mxu0 0.0
    %224 = vmatprep.subr.mxu0 0.0
    %225 = vmatpush1.msra.mxu0 0.0
    %226 = vmatprep.subr.mxu0 0.0
    %227 = vmatpush1.msra.mxu0 0.0
    %228 = vmatprep.subr.mxu0 0.0
    %229 = vmatpush1.msra.mxu0 0.0
    %230 = vmatprep.subr.mxu0 0.0
    %231 = vmatpush1.msra.mxu0 0.0
    %232 = vmatprep.subr.mxu0 0.0
    %233 = vmatpush1.msra.mxu0 0.0
    %234 = vmatprep.mubr.f32.mxu0 0.0
    %235 = vmatmul.mubr.f32.gmra.mrb[0].mxu0 %v165
    %v236 = vpop.f32.mrb[0].mxu0
    %v237 = vadd.f32 %v163, %v236
    %v238 = vpop.f32.mrb[0].mxu0
    %239 = vmatprep.mubr.f32.mxu0 0.0
    %240 = vmatmul.mubr.f32.gmra.mrb[0].mxu0 %v168
    %v241 = vpop.f32.mrb[0].mxu0
    %v242 = vadd.f32 %v163, %v241
    %v243 = vpop.f32.mrb[0].mxu0
    %244 = vdwg.mxu0
    %v245 = vlaneseq
    %v246 = vshrl.u32 %v245, 7
    %v247 = vsub.s32 0, %v246
    %v248 = vrot.slane %v64, %v247
    %v250 = vsel %vm78, %v32, 0
    %v253 = vsel %vm78, %v33, 0
    %255 = vmatprep.subr.mxu0 0.0
    %256 = vmatpush1.msra.mxu0 %v42
    %257 = vmatprep.subr.mxu0 0.0
    %258 = vmatpush1.msra.mxu0 %v43
    %259 = vmatprep.subr.mxu0 0.0
    %260 = vmatpush1.msra.mxu0 %v44
    %261 = vmatprep.subr.mxu0 0.0
    %262 = vmatpush1.msra.mxu0 %v45
    %263 = vmatprep.subr.mxu0 0.0
    %264 = vmatpush1.msra.mxu0 0.0
    %265 = vmatprep.subr.mxu0 0.0
    %266 = vmatpush1.msra.mxu0 0.0
    %267 = vmatprep.subr.mxu0 0.0
    %268 = vmatpush1.msra.mxu0 0.0
    %269 = vmatprep.subr.mxu0 0.0
    %270 = vmatpush1.msra.mxu0 0.0
    %271 = vmatprep.subr.mxu0 0.0
    %272 = vmatpush1.msra.mxu0 0.0
    %273 = vmatprep.subr.mxu0 0.0
    %274 = vmatpush1.msra.mxu0 0.0
    %275 = vmatprep.subr.mxu0 0.0
    %276 = vmatpush1.msra.mxu0 0.0
    %277 = vmatprep.subr.mxu0 0.0
    %278 = vmatpush1.msra.mxu0 0.0
    %279 = vmatprep.subr.mxu0 0.0
    %280 = vmatpush1.msra.mxu0 0.0
    %281 = vmatprep.subr.mxu0 0.0
    %282 = vmatpush1.msra.mxu0 0.0
    %283 = vmatprep.subr.mxu0 0.0
    %284 = vmatpush1.msra.mxu0 0.0
    %285 = vmatprep.subr.mxu0 0.0
    %286 = vmatpush1.msra.mxu0 0.0
    %287 = vmatprep.subr.mxu0 0.0
    %288 = vmatpush1.msra.mxu0 0.0
    %289 = vmatprep.subr.mxu0 0.0
    %290 = vmatpush1.msra.mxu0 0.0
    %291 = vmatprep.subr.mxu0 0.0
    %292 = vmatpush1.msra.mxu0 0.0
    %293 = vmatprep.subr.mxu0 0.0
    %294 = vmatpush1.msra.mxu0 0.0
    %295 = vmatprep.subr.mxu0 0.0
    %296 = vmatpush1.msra.mxu0 0.0
    %297 = vmatprep.subr.mxu0 0.0
    %298 = vmatpush1.msra.mxu0 0.0
    %299 = vmatprep.subr.mxu0 0.0
    %300 = vmatpush1.msra.mxu0 0.0
    %301 = vmatprep.subr.mxu0 0.0
    %302 = vmatpush1.msra.mxu0 0.0
    %303 = vmatprep.subr.mxu0 0.0
    %304 = vmatpush1.msra.mxu0 0.0
    %305 = vmatprep.subr.mxu0 0.0
    %306 = vmatpush1.msra.mxu0 0.0
    %307 = vmatprep.subr.mxu0 0.0
    %308 = vmatpush1.msra.mxu0 0.0
    %309 = vmatprep.subr.mxu0 0.0
    %310 = vmatpush1.msra.mxu0 0.0
    %311 = vmatprep.subr.mxu0 0.0
    %312 = vmatpush1.msra.mxu0 0.0
    %313 = vmatprep.subr.mxu0 0.0
    %314 = vmatpush1.msra.mxu0 0.0
    %315 = vmatprep.subr.mxu0 0.0
    %316 = vmatpush1.msra.mxu0 0.0
    %317 = vmatprep.subr.mxu0 0.0
    %318 = vmatpush1.msra.mxu0 0.0
    %319 = vmatprep.mubr.f32.mxu0 0.0
    %320 = vmatmul.mubr.f32.gmra.mrb[0].mxu0 %v250
    %v321 = vpop.f32.mrb[0].mxu0
    %v322 = vadd.f32 %v248, %v321
    %v323 = vpop.f32.mrb[0].mxu0
    %324 = vmatprep.mubr.f32.mxu0 0.0
    %325 = vmatmul.mubr.f32.gmra.mrb[0].mxu0 %v253
    %v326 = vpop.f32.mrb[0].mxu0
    %v327 = vadd.f32 %v248, %v326
    %v328 = vpop.f32.mrb[0].mxu0
    %329 = vdwg.mxu0
    %vm330 = vcmask 64512
    %v332 = vsel %vm330, %v152, 0
    %v335 = vsel %vm330, %v157, 0
    %v338 = vsel %vm330, %v237, 0
    %v341 = vsel %vm330, %v242, 0
    %343 = vmatprep.subr.mxu0 0.0
    %344 = vmatpush1.xpose.msra.mxu0 %v338
    %345 = vmatprep.subr.mxu0 0.0
    %346 = vmatpush1.xpose.msra.mxu0 %v341
    %347 = vmatprep.subr.mxu0 0.0
    %348 = vmatpush1.xpose.msra.mxu0 0.0
    %349 = vmatprep.subr.mxu0 0.0
    %350 = vmatpush1.xpose.msra.mxu0 0.0
    %351 = vmatprep.subr.mxu0 0.0
    %352 = vmatpush1.xpose.msra.mxu0 0.0
    %353 = vmatprep.subr.mxu0 0.0
    %354 = vmatpush1.xpose.msra.mxu0 0.0
    %355 = vmatprep.subr.mxu0 0.0
    %356 = vmatpush1.xpose.msra.mxu0 0.0
    %357 = vmatprep.subr.mxu0 0.0
    %358 = vmatpush1.xpose.msra.mxu0 0.0
    %359 = vmatprep.subr.mxu0 0.0
    %360 = vmatpush1.xpose.msra.mxu0 0.0
    %361 = vmatprep.subr.mxu0 0.0
    %362 = vmatpush1.xpose.msra.mxu0 0.0
    %363 = vmatprep.subr.mxu0 0.0
    %364 = vmatpush1.xpose.msra.mxu0 0.0
    %365 = vmatprep.subr.mxu0 0.0
    %366 = vmatpush1.xpose.msra.mxu0 0.0
    %367 = vmatprep.subr.mxu0 0.0
    %368 = vmatpush1.xpose.msra.mxu0 0.0
    %369 = vmatprep.subr.mxu0 0.0
    %370 = vmatpush1.xpose.msra.mxu0 0.0
    %371 = vmatprep.subr.mxu0 0.0
    %372 = vmatpush1.xpose.msra.mxu0 0.0
    %373 = vmatprep.subr.mxu0 0.0
    %374 = vmatpush1.xpose.msra.mxu0 0.0
    %375 = vmatprep.subr.mxu0 0.0
    %376 = vmatpush1.xpose.msra.mxu0 0.0
    %377 = vmatprep.subr.mxu0 0.0
    %378 = vmatpush1.xpose.msra.mxu0 0.0
    %379 = vmatprep.subr.mxu0 0.0
    %380 = vmatpush1.xpose.msra.mxu0 0.0
    %381 = vmatprep.subr.mxu0 0.0
    %382 = vmatpush1.xpose.msra.mxu0 0.0
    %383 = vmatprep.subr.mxu0 0.0
    %384 = vmatpush1.xpose.msra.mxu0 0.0
    %385 = vmatprep.subr.mxu0 0.0
    %386 = vmatpush1.xpose.msra.mxu0 0.0
    %387 = vmatprep.subr.mxu0 0.0
    %388 = vmatpush1.xpose.msra.mxu0 0.0
    %389 = vmatprep.subr.mxu0 0.0
    %390 = vmatpush1.xpose.msra.mxu0 0.0
    %391 = vmatprep.subr.mxu0 0.0
    %392 = vmatpush1.xpose.msra.mxu0 0.0
    %393 = vmatprep.subr.mxu0 0.0
    %394 = vmatpush1.xpose.msra.mxu0 0.0
    %395 = vmatprep.subr.mxu0 0.0
    %396 = vmatpush1.xpose.msra.mxu0 0.0
    %397 = vmatprep.subr.mxu0 0.0
    %398 = vmatpush1.xpose.msra.mxu0 0.0
    %399 = vmatprep.subr.mxu0 0.0
    %400 = vmatpush1.xpose.msra.mxu0 0.0
    %401 = vmatprep.subr.mxu0 0.0
    %402 = vmatpush1.xpose.msra.mxu0 0.0
    %403 = vmatprep.subr.mxu0 0.0
    %404 = vmatpush1.xpose.msra.mxu0 0.0
    %405 = vmatprep.subr.mxu0 0.0
    %406 = vmatpush1.xpose.msra.mxu0 0.0
    %407 = vmatprep.mubr.f32.mxu0 0.0
    %408 = vmatmul.mubr.f32.gmra.mrb[0].mxu0 %v332
    %v409 = vpop.f32.mrb[0].mxu0
    %v410 = vadd.f32 %v72, %v409
    %v411 = vpop.f32.mrb[0].mxu0
    %412 = vmatprep.mubr.f32.mxu0 0.0
    %413 = vmatmul.mubr.f32.gmra.mrb[0].mxu0 %v335
    %v414 = vpop.f32.mrb[0].mxu0
    %v415 = vadd.f32 %v73, %v414
    %v416 = vpop.f32.mrb[0].mxu0
    %417 = vdwg.mxu0
    %vm418 = vcmask 130048
    %v419 = vsel %vm418, %v410, -inf
    %420 = vmax.xlane.f32.xlu0 %v419
    %v421 = vpop.xlane.xlu0 %420
    %v422 = vsel %vm418, %v415, -inf
    %423 = vmax.xlane.f32.xlu0 %v422
    %v424 = vpop.xlane.xlu0 %423
    %v425 = vsub.f32 %v410, %v421
    %v426 = vsub.f32 %v415, %v424
    %v427 = vmul.f32 %v425, 1.442695
    %v428 = vpow.pop %v427
    %v429 = vmul.f32 %v426, 1.442695
    %v430 = vpow.pop %v429
    %v431 = vsel %vm418, %v428, 0.0
    %432 = vadd.xlane.f32.xlu0 %v431
    %v433 = vpop.xlane.xlu0 %432
    %v434 = vsel %vm418, %v430, 0.0
    %435 = vadd.xlane.f32.xlu0 %v434
    %v436 = vpop.xlane.xlu0 %435
    %v437 = vrcp.pop %v433
    %v438 = vmul.f32 %v428, %v437
    %v439 = vrcp.pop %v436
    %v440 = vmul.f32 %v430, %v439
    %v442 = vsel %vm418, %v438, 0
    %v445 = vsel %vm418, %v440, 0
    %447 = vmatprep.subr.mxu0 0.0
    %448 = vmatpush1.msra.mxu0 %v322
    %449 = vmatprep.subr.mxu0 0.0
    %450 = vmatpush1.msra.mxu0 %v327
    %451 = vmatprep.subr.mxu0 0.0
    %452 = vmatpush1.msra.mxu0 0.0
    %453 = vmatprep.subr.mxu0 0.0
    %454 = vmatpush1.msra.mxu0 0.0
    %455 = vmatprep.subr.mxu0 0.0
    %456 = vmatpush1.msra.mxu0 0.0
    %457 = vmatprep.subr.mxu0 0.0
    %458 = vmatpush1.msra.mxu0 0.0
    %459 = vmatprep.subr.mxu0 0.0
    %460 = vmatpush1.msra.mxu0 0.0
    %461 = vmatprep.subr.mxu0 0.0
    %462 = vmatpush1.msra.mxu0 0.0
    %463 = vmatprep.subr.mxu0 0.0
    %464 = vmatpush1.msra.mxu0 0.0
    %465 = vmatprep.subr.mxu0 0.0
    %466 = vmatpush1.msra.mxu0 0.0
    %467 = vmatprep.subr.mxu0 0.0
    %468 = vmatpush1.msra.mxu0 0.0
    %469 = vmatprep.subr.mxu0 0.0
    %470 = vmatpush1.msra.mxu0 0.0
    %471 = vmatprep.subr.mxu0 0.0
    %472 = vmatpush1.msra.mxu0 0.0
    %473 = vmatprep.subr.mxu0 0.0
    %474 = vmatpush1.msra.mxu0 0.0
    %475 = vmatprep.subr.mxu0 0.0
    %476 = vmatpush1.msra.mxu0 0.0
    %477 = vmatprep.subr.mxu0 0.0
    %478 = vmatpush1.msra.mxu0 0.0
    %479 = vmatprep.subr.mxu0 0.0
    %480 = vmatpush1.msra.mxu0 0.0
    %481 = vmatprep.subr.mxu0 0.0
    %482 = vmatpush1.msra.mxu0 0.0
    %483 = vmatprep.subr.mxu0 0.0
    %484 = vmatpush1.msra.mxu0 0.0
    %485 = vmatprep.subr.mxu0 0.0
    %486 = vmatpush1.msra.mxu0 0.0
    %487 = vmatprep.subr.mxu0 0.0
    %488 = vmatpush1.msra.mxu0 0.0
    %489 = vmatprep.subr.mxu0 0.0
    %490 = vmatpush1.msra.mxu0 0.0
    %491 = vmatprep.subr.mxu0 0.0
    %492 = vmatpush1.msra.mxu0 0.0
    %493 = vmatprep.subr.mxu0 0.0
    %494 = vmatpush1.msra.mxu0 0.0
    %495 = vmatprep.subr.mxu0 0.0
    %496 = vmatpush1.msra.mxu0 0.0
    %497 = vmatprep.subr.mxu0 0.0
    %498 = vmatpush1.msra.mxu0 0.0
    %499 = vmatprep.subr.mxu0 0.0
    %500 = vmatpush1.msra.mxu0 0.0
    %501 = vmatprep.subr.mxu0 0.0
    %502 = vmatpush1.msra.mxu0 0.0
    %503 = vmatprep.subr.mxu0 0.0
    %504 = vmatpush1.msra.mxu0 0.0
    %505 = vmatprep.subr.mxu0 0.0
    %506 = vmatpush1.msra.mxu0 0.0
    %507 = vmatprep.subr.mxu0 0.0
    %508 = vmatpush1.msra.mxu0 0.0
    %509 = vmatprep.subr.mxu0 0.0
    %510 = vmatpush1.msra.mxu0 0.0
    %511 = vmatprep.mubr.f32.mxu0 0.0
    %512 = vmatmul.mubr.f32.gmra.mrb[0].mxu0 %v442
    %v513 = vpop.f32.mrb[0].mxu0
    %v514 = vadd.f32 0.0, %v513
    %v515 = vpop.f32.mrb[0].mxu0
    %516 = vmatprep.mubr.f32.mxu0 0.0
    %517 = vmatmul.mubr.f32.gmra.mrb[0].mxu0 %v445
    %v518 = vpop.f32.mrb[0].mxu0
    %v519 = vadd.f32 0.0, %v518
    %v520 = vpop.f32.mrb[0].mxu0
    %521 = vdwg.mxu0
    %522 = vrot.lane.b32.xlu0 %v152, 120
    %v523 = vpop.permute.xlu0 %522
    %524 = vrot.lane.b32.xlu0 %v157, 120
    %v525 = vpop.permute.xlu0 %524
    %526 = vrot.lane.b32.xlu0 %v237, 120
    %v527 = vpop.permute.xlu0 %526
    %528 = vrot.lane.b32.xlu0 %v242, 120
    %v529 = vpop.permute.xlu0 %528
    %v530 = vsel %vm330, %v523, 0
    %v532 = vsel %vm330, %v525, 0
    %v534 = vsel %vm330, %v527, 0
    %v536 = vsel %vm330, %v529, 0
    %538 = vmatprep.subr.mxu0 0.0
    %539 = vmatpush1.xpose.msra.mxu0 %v534
    %540 = vmatprep.subr.mxu0 0.0
    %541 = vmatpush1.xpose.msra.mxu0 %v536
    %542 = vmatprep.subr.mxu0 0.0
    %543 = vmatpush1.xpose.msra.mxu0 0.0
    %544 = vmatprep.subr.mxu0 0.0
    %545 = vmatpush1.xpose.msra.mxu0 0.0
    %546 = vmatprep.subr.mxu0 0.0
    %547 = vmatpush1.xpose.msra.mxu0 0.0
    %548 = vmatprep.subr.mxu0 0.0
    %549 = vmatpush1.xpose.msra.mxu0 0.0
    %550 = vmatprep.subr.mxu0 0.0
    %551 = vmatpush1.xpose.msra.mxu0 0.0
    %552 = vmatprep.subr.mxu0 0.0
    %553 = vmatpush1.xpose.msra.mxu0 0.0
    %554 = vmatprep.subr.mxu0 0.0
    %555 = vmatpush1.xpose.msra.mxu0 0.0
    %556 = vmatprep.subr.mxu0 0.0
    %557 = vmatpush1.xpose.msra.mxu0 0.0
    %558 = vmatprep.subr.mxu0 0.0
    %559 = vmatpush1.xpose.msra.mxu0 0.0
    %560 = vmatprep.subr.mxu0 0.0
    %561 = vmatpush1.xpose.msra.mxu0 0.0
    %562 = vmatprep.subr.mxu0 0.0
    %563 = vmatpush1.xpose.msra.mxu0 0.0
    %564 = vmatprep.subr.mxu0 0.0
    %565 = vmatpush1.xpose.msra.mxu0 0.0
    %566 = vmatprep.subr.mxu0 0.0
    %567 = vmatpush1.xpose.msra.mxu0 0.0
    %568 = vmatprep.subr.mxu0 0.0
    %569 = vmatpush1.xpose.msra.mxu0 0.0
    %570 = vmatprep.subr.mxu0 0.0
    %571 = vmatpush1.xpose.msra.mxu0 0.0
    %572 = vmatprep.subr.mxu0 0.0
    %573 = vmatpush1.xpose.msra.mxu0 0.0
    %574 = vmatprep.subr.mxu0 0.0
    %575 = vmatpush1.xpose.msra.mxu0 0.0
    %576 = vmatprep.subr.mxu0 0.0
    %577 = vmatpush1.xpose.msra.mxu0 0.0
    %578 = vmatprep.subr.mxu0 0.0
    %579 = vmatpush1.xpose.msra.mxu0 0.0
    %580 = vmatprep.subr.mxu0 0.0
    %581 = vmatpush1.xpose.msra.mxu0 0.0
    %582 = vmatprep.subr.mxu0 0.0
    %583 = vmatpush1.xpose.msra.mxu0 0.0
    %584 = vmatprep.subr.mxu0 0.0
    %585 = vmatpush1.xpose.msra.mxu0 0.0
    %586 = vmatprep.subr.mxu0 0.0
    %587 = vmatpush1.xpose.msra.mxu0 0.0
    %588 = vmatprep.subr.mxu0 0.0
    %589 = vmatpush1.xpose.msra.mxu0 0.0
    %590 = vmatprep.subr.mxu0 0.0
    %591 = vmatpush1.xpose.msra.mxu0 0.0
    %592 = vmatprep.subr.mxu0 0.0
    %593 = vmatpush1.xpose.msra.mxu0 0.0
    %594 = vmatprep.subr.mxu0 0.0
    %595 = vmatpush1.xpose.msra.mxu0 0.0
    %596 = vmatprep.subr.mxu0 0.0
    %597 = vmatpush1.xpose.msra.mxu0 0.0
    %598 = vmatprep.subr.mxu0 0.0
    %599 = vmatpush1.xpose.msra.mxu0 0.0
    %600 = vmatprep.subr.mxu0 0.0
    %601 = vmatpush1.xpose.msra.mxu0 0.0
    %602 = vmatprep.mubr.f32.mxu0 0.0
    %603 = vmatmul.mubr.f32.gmra.mrb[0].mxu0 %v530
    %v604 = vpop.f32.mrb[0].mxu0
    %v605 = vadd.f32 %v72, %v604
    %v606 = vpop.f32.mrb[0].mxu0
    %607 = vmatprep.mubr.f32.mxu0 0.0
    %608 = vmatmul.mubr.f32.gmra.mrb[0].mxu0 %v532
    %v609 = vpop.f32.mrb[0].mxu0
    %v610 = vadd.f32 %v73, %v609
    %v611 = vpop.f32.mrb[0].mxu0
    %612 = vdwg.mxu0
    %v613 = vsel %vm418, %v605, -inf
    %614 = vmax.xlane.f32.xlu0 %v613
    %v615 = vpop.xlane.xlu0 %614
    %v616 = vsel %vm418, %v610, -inf
    %617 = vmax.xlane.f32.xlu0 %v616
    %v618 = vpop.xlane.xlu0 %617
    %v619 = vsub.f32 %v605, %v615
    %v620 = vsub.f32 %v610, %v618
    %v621 = vmul.f32 %v619, 1.442695
    %v622 = vpow.pop %v621
    %v623 = vmul.f32 %v620, 1.442695
    %v624 = vpow.pop %v623
    %v625 = vsel %vm418, %v622, 0.0
    %626 = vadd.xlane.f32.xlu0 %v625
    %v627 = vpop.xlane.xlu0 %626
    %v628 = vsel %vm418, %v624, 0.0
    %629 = vadd.xlane.f32.xlu0 %v628
    %v630 = vpop.xlane.xlu0 %629
    %v631 = vrcp.pop %v627
    %v632 = vmul.f32 %v622, %v631
    %v633 = vrcp.pop %v630
    %v634 = vmul.f32 %v624, %v633
    %637 = vrot.lane.b32.xlu0 %v322, 120
    %v638 = vpop.permute.xlu0 %637
    %639 = vrot.lane.b32.xlu0 %v327, 120
    %v640 = vpop.permute.xlu0 %639
    %v644 = vsel %vm418, %v632, 0
    %v647 = vsel %vm418, %v634, 0
    %649 = vmatprep.subr.mxu0 0.0
    %650 = vmatpush1.msra.mxu0 %v638
    %651 = vmatprep.subr.mxu0 0.0
    %652 = vmatpush1.msra.mxu0 %v640
    %653 = vmatprep.subr.mxu0 0.0
    %654 = vmatpush1.msra.mxu0 0.0
    %655 = vmatprep.subr.mxu0 0.0
    %656 = vmatpush1.msra.mxu0 0.0
    %657 = vmatprep.subr.mxu0 0.0
    %658 = vmatpush1.msra.mxu0 0.0
    %659 = vmatprep.subr.mxu0 0.0
    %660 = vmatpush1.msra.mxu0 0.0
    %661 = vmatprep.subr.mxu0 0.0
    %662 = vmatpush1.msra.mxu0 0.0
    %663 = vmatprep.subr.mxu0 0.0
    %664 = vmatpush1.msra.mxu0 0.0
    %665 = vmatprep.subr.mxu0 0.0
    %666 = vmatpush1.msra.mxu0 0.0
    %667 = vmatprep.subr.mxu0 0.0
    %668 = vmatpush1.msra.mxu0 0.0
    %669 = vmatprep.subr.mxu0 0.0
    %670 = vmatpush1.msra.mxu0 0.0
    %671 = vmatprep.subr.mxu0 0.0
    %672 = vmatpush1.msra.mxu0 0.0
    %673 = vmatprep.subr.mxu0 0.0
    %674 = vmatpush1.msra.mxu0 0.0
    %675 = vmatprep.subr.mxu0 0.0
    %676 = vmatpush1.msra.mxu0 0.0
    %677 = vmatprep.subr.mxu0 0.0
    %678 = vmatpush1.msra.mxu0 0.0
    %679 = vmatprep.subr.mxu0 0.0
    %680 = vmatpush1.msra.mxu0 0.0
    %681 = vmatprep.subr.mxu0 0.0
    %682 = vmatpush1.msra.mxu0 0.0
    %683 = vmatprep.subr.mxu0 0.0
    %684 = vmatpush1.msra.mxu0 0.0
    %685 = vmatprep.subr.mxu0 0.0
    %686 = vmatpush1.msra.mxu0 0.0
    %687 = vmatprep.subr.mxu0 0.0
    %688 = vmatpush1.msra.mxu0 0.0
    %689 = vmatprep.subr.mxu0 0.0
    %690 = vmatpush1.msra.mxu0 0.0
    %691 = vmatprep.subr.mxu0 0.0
    %692 = vmatpush1.msra.mxu0 0.0
    %693 = vmatprep.subr.mxu0 0.0
    %694 = vmatpush1.msra.mxu0 0.0
    %695 = vmatprep.subr.mxu0 0.0
    %696 = vmatpush1.msra.mxu0 0.0
    %697 = vmatprep.subr.mxu0 0.0
    %698 = vmatpush1.msra.mxu0 0.0
    %699 = vmatprep.subr.mxu0 0.0
    %700 = vmatpush1.msra.mxu0 0.0
    %701 = vmatprep.subr.mxu0 0.0
    %702 = vmatpush1.msra.mxu0 0.0
    %703 = vmatprep.subr.mxu0 0.0
    %704 = vmatpush1.msra.mxu0 0.0
    %705 = vmatprep.subr.mxu0 0.0
    %706 = vmatpush1.msra.mxu0 0.0
    %707 = vmatprep.subr.mxu0 0.0
    %708 = vmatpush1.msra.mxu0 0.0
    %709 = vmatprep.subr.mxu0 0.0
    %710 = vmatpush1.msra.mxu0 0.0
    %711 = vmatprep.subr.mxu0 0.0
    %712 = vmatpush1.msra.mxu0 0.0
    %713 = vmatprep.mubr.f32.mxu0 0.0
    %714 = vmatmul.mubr.f32.gmra.mrb[0].mxu0 %v644
    %v715 = vpop.f32.mrb[0].mxu0
    %v716 = vadd.f32 0.0, %v715
    %v717 = vpop.f32.mrb[0].mxu0
    %718 = vmatprep.mubr.f32.mxu0 0.0
    %719 = vmatmul.mubr.f32.gmra.mrb[0].mxu0 %v647
    %v720 = vpop.f32.mrb[0].mxu0
    %v721 = vadd.f32 0.0, %v720
    %v722 = vpop.f32.mrb[0].mxu0
    %723 = vdwg.mxu0
    %724 = vrot.lane.b32.xlu0 %v152, 112
    %v725 = vpop.permute.xlu0 %724
    %726 = vrot.lane.b32.xlu0 %v157, 112
    %v727 = vpop.permute.xlu0 %726
    %728 = vrot.lane.b32.xlu0 %v237, 112
    %v729 = vpop.permute.xlu0 %728
    %730 = vrot.lane.b32.xlu0 %v242, 112
    %v731 = vpop.permute.xlu0 %730
    %v732 = vsel %vm330, %v725, 0
    %v734 = vsel %vm330, %v727, 0
    %v736 = vsel %vm330, %v729, 0
    %v738 = vsel %vm330, %v731, 0
    %740 = vmatprep.subr.mxu0 0.0
    %741 = vmatpush1.xpose.msra.mxu0 %v736
    %742 = vmatprep.subr.mxu0 0.0
    %743 = vmatpush1.xpose.msra.mxu0 %v738
    %744 = vmatprep.subr.mxu0 0.0
    %745 = vmatpush1.xpose.msra.mxu0 0.0
    %746 = vmatprep.subr.mxu0 0.0
    %747 = vmatpush1.xpose.msra.mxu0 0.0
    %748 = vmatprep.subr.mxu0 0.0
    %749 = vmatpush1.xpose.msra.mxu0 0.0
    %750 = vmatprep.subr.mxu0 0.0
    %751 = vmatpush1.xpose.msra.mxu0 0.0
    %752 = vmatprep.subr.mxu0 0.0
    %753 = vmatpush1.xpose.msra.mxu0 0.0
    %754 = vmatprep.subr.mxu0 0.0
    %755 = vmatpush1.xpose.msra.mxu0 0.0
    %756 = vmatprep.subr.mxu0 0.0
    %757 = vmatpush1.xpose.msra.mxu0 0.0
    %758 = vmatprep.subr.mxu0 0.0
    %759 = vmatpush1.xpose.msra.mxu0 0.0
    %760 = vmatprep.subr.mxu0 0.0
    %761 = vmatpush1.xpose.msra.mxu0 0.0
    %762 = vmatprep.subr.mxu0 0.0
    %763 = vmatpush1.xpose.msra.mxu0 0.0
    %764 = vmatprep.subr.mxu0 0.0
    %765 = vmatpush1.xpose.msra.mxu0 0.0
    %766 = vmatprep.subr.mxu0 0.0
    %767 = vmatpush1.xpose.msra.mxu0 0.0
    %768 = vmatprep.subr.mxu0 0.0
    %769 = vmatpush1.xpose.msra.mxu0 0.0
    %770 = vmatprep.subr.mxu0 0.0
    %771 = vmatpush1.xpose.msra.mxu0 0.0
    %772 = vmatprep.subr.mxu0 0.0
    %773 = vmatpush1.xpose.msra.mxu0 0.0
    %774 = vmatprep.subr.mxu0 0.0
    %775 = vmatpush1.xpose.msra.mxu0 0.0
    %776 = vmatprep.subr.mxu0 0.0
    %777 = vmatpush1.xpose.msra.mxu0 0.0
    %778 = vmatprep.subr.mxu0 0.0
    %779 = vmatpush1.xpose.msra.mxu0 0.0
    %780 = vmatprep.subr.mxu0 0.0
    %781 = vmatpush1.xpose.msra.mxu0 0.0
    %782 = vmatprep.subr.mxu0 0.0
    %783 = vmatpush1.xpose.msra.mxu0 0.0
    %784 = vmatprep.subr.mxu0 0.0
    %785 = vmatpush1.xpose.msra.mxu0 0.0
    %786 = vmatprep.subr.mxu0 0.0
    %787 = vmatpush1.xpose.msra.mxu0 0.0
    %788 = vmatprep.subr.mxu0 0.0
    %789 = vmatpush1.xpose.msra.mxu0 0.0
    %790 = vmatprep.subr.mxu0 0.0
    %791 = vmatpush1.xpose.msra.mxu0 0.0
    %792 = vmatprep.subr.mxu0 0.0
    %793 = vmatpush1.xpose.msra.mxu0 0.0
    %794 = vmatprep.subr.mxu0 0.0
    %795 = vmatpush1.xpose.msra.mxu0 0.0
    %796 = vmatprep.subr.mxu0 0.0
    %797 = vmatpush1.xpose.msra.mxu0 0.0
    %798 = vmatprep.subr.mxu0 0.0
    %799 = vmatpush1.xpose.msra.mxu0 0.0
    %800 = vmatprep.subr.mxu0 0.0
    %801 = vmatpush1.xpose.msra.mxu0 0.0
    %802 = vmatprep.subr.mxu0 0.0
    %803 = vmatpush1.xpose.msra.mxu0 0.0
    %804 = vmatprep.mubr.f32.mxu0 0.0
    %805 = vmatmul.mubr.f32.gmra.mrb[0].mxu0 %v732
    %v806 = vpop.f32.mrb[0].mxu0
    %v807 = vadd.f32 %v72, %v806
    %v808 = vpop.f32.mrb[0].mxu0
    %809 = vmatprep.mubr.f32.mxu0 0.0
    %810 = vmatmul.mubr.f32.gmra.mrb[0].mxu0 %v734
    %v811 = vpop.f32.mrb[0].mxu0
    %v812 = vadd.f32 %v73, %v811
    %v813 = vpop.f32.mrb[0].mxu0
    %814 = vdwg.mxu0
    %v815 = vsel %vm418, %v807, -inf
    %816 = vmax.xlane.f32.xlu0 %v815
    %v817 = vpop.xlane.xlu0 %816
    %v818 = vsel %vm418, %v812, -inf
    %819 = vmax.xlane.f32.xlu0 %v818
    %v820 = vpop.xlane.xlu0 %819
    %v821 = vsub.f32 %v807, %v817
    %v822 = vsub.f32 %v812, %v820
    %v823 = vmul.f32 %v821, 1.442695
    %v824 = vpow.pop %v823
    %v825 = vmul.f32 %v822, 1.442695
    %v826 = vpow.pop %v825
    %v827 = vsel %vm418, %v824, 0.0
    %828 = vadd.xlane.f32.xlu0 %v827
    %v829 = vpop.xlane.xlu0 %828
    %v830 = vsel %vm418, %v826, 0.0
    %831 = vadd.xlane.f32.xlu0 %v830
    %v832 = vpop.xlane.xlu0 %831
    %v833 = vrcp.pop %v829
    %v834 = vmul.f32 %v824, %v833
    %v835 = vrcp.pop %v832
    %v836 = vmul.f32 %v826, %v835
    %837 = vrot.lane.b32.xlu0 %v322, 112
    %v838 = vpop.permute.xlu0 %837
    %839 = vrot.lane.b32.xlu0 %v327, 112
    %v840 = vpop.permute.xlu0 %839
    %v844 = vsel %vm418, %v834, 0
    %v847 = vsel %vm418, %v836, 0
    %849 = vmatprep.subr.mxu0 0.0
    %850 = vmatpush1.msra.mxu0 %v838
    %851 = vmatprep.subr.mxu0 0.0
    %852 = vmatpush1.msra.mxu0 %v840
    %853 = vmatprep.subr.mxu0 0.0
    %854 = vmatpush1.msra.mxu0 0.0
    %855 = vmatprep.subr.mxu0 0.0
    %856 = vmatpush1.msra.mxu0 0.0
    %857 = vmatprep.subr.mxu0 0.0
    %858 = vmatpush1.msra.mxu0 0.0
    %859 = vmatprep.subr.mxu0 0.0
    %860 = vmatpush1.msra.mxu0 0.0
    %861 = vmatprep.subr.mxu0 0.0
    %862 = vmatpush1.msra.mxu0 0.0
    %863 = vmatprep.subr.mxu0 0.0
    %864 = vmatpush1.msra.mxu0 0.0
    %865 = vmatprep.subr.mxu0 0.0
    %866 = vmatpush1.msra.mxu0 0.0
    %867 = vmatprep.subr.mxu0 0.0
    %868 = vmatpush1.msra.mxu0 0.0
    %869 = vmatprep.subr.mxu0 0.0
    %870 = vmatpush1.msra.mxu0 0.0
    %871 = vmatprep.subr.mxu0 0.0
    %872 = vmatpush1.msra.mxu0 0.0
    %873 = vmatprep.subr.mxu0 0.0
    %874 = vmatpush1.msra.mxu0 0.0
    %875 = vmatprep.subr.mxu0 0.0
    %876 = vmatpush1.msra.mxu0 0.0
    %877 = vmatprep.subr.mxu0 0.0
    %878 = vmatpush1.msra.mxu0 0.0
    %879 = vmatprep.subr.mxu0 0.0
    %880 = vmatpush1.msra.mxu0 0.0
    %881 = vmatprep.subr.mxu0 0.0
    %882 = vmatpush1.msra.mxu0 0.0
    %883 = vmatprep.subr.mxu0 0.0
    %884 = vmatpush1.msra.mxu0 0.0
    %885 = vmatprep.subr.mxu0 0.0
    %886 = vmatpush1.msra.mxu0 0.0
    %887 = vmatprep.subr.mxu0 0.0
    %888 = vmatpush1.msra.mxu0 0.0
    %889 = vmatprep.subr.mxu0 0.0
    %890 = vmatpush1.msra.mxu0 0.0
    %891 = vmatprep.subr.mxu0 0.0
    %892 = vmatpush1.msra.mxu0 0.0
    %893 = vmatprep.subr.mxu0 0.0
    %894 = vmatpush1.msra.mxu0 0.0
    %895 = vmatprep.subr.mxu0 0.0
    %896 = vmatpush1.msra.mxu0 0.0
    %897 = vmatprep.subr.mxu0 0.0
    %898 = vmatpush1.msra.mxu0 0.0
    %899 = vmatprep.subr.mxu0 0.0
    %900 = vmatpush1.msra.mxu0 0.0
    %901 = vmatprep.subr.mxu0 0.0
    %902 = vmatpush1.msra.mxu0 0.0
    %903 = vmatprep.subr.mxu0 0.0
    %904 = vmatpush1.msra.mxu0 0.0
    %905 = vmatprep.subr.mxu0 0.0
    %906 = vmatpush1.msra.mxu0 0.0
    %907 = vmatprep.subr.mxu0 0.0
    %908 = vmatpush1.msra.mxu0 0.0
    %909 = vmatprep.subr.mxu0 0.0
    %910 = vmatpush1.msra.mxu0 0.0
    %911 = vmatprep.subr.mxu0 0.0
    %912 = vmatpush1.msra.mxu0 0.0
    %913 = vmatprep.mubr.f32.mxu0 0.0
    %914 = vmatmul.mubr.f32.gmra.mrb[0].mxu0 %v844
    %v915 = vpop.f32.mrb[0].mxu0
    %v916 = vadd.f32 0.0, %v915
    %v917 = vpop.f32.mrb[0].mxu0
    %918 = vmatprep.mubr.f32.mxu0 0.0
    %919 = vmatmul.mubr.f32.gmra.mrb[0].mxu0 %v847
    %v920 = vpop.f32.mrb[0].mxu0
    %v921 = vadd.f32 0.0, %v920
    %v922 = vpop.f32.mrb[0].mxu0
    %923 = vdwg.mxu0
    %924 = vrot.lane.b32.xlu0 %v152, 104
    %v925 = vpop.permute.xlu0 %924
    %926 = vrot.lane.b32.xlu0 %v157, 104
    %v927 = vpop.permute.xlu0 %926
    %928 = vrot.lane.b32.xlu0 %v237, 104
    %v929 = vpop.permute.xlu0 %928
    %930 = vrot.lane.b32.xlu0 %v242, 104
    %v931 = vpop.permute.xlu0 %930
    %v932 = vsel %vm330, %v925, 0
    %v934 = vsel %vm330, %v927, 0
    %v936 = vsel %vm330, %v929, 0
    %v938 = vsel %vm330, %v931, 0
    %940 = vmatprep.subr.mxu0 0.0
    %941 = vmatpush1.xpose.msra.mxu0 %v936
    %942 = vmatprep.subr.mxu0 0.0
    %943 = vmatpush1.xpose.msra.mxu0 %v938
    %944 = vmatprep.subr.mxu0 0.0
    %945 = vmatpush1.xpose.msra.mxu0 0.0
    %946 = vmatprep.subr.mxu0 0.0
    %947 = vmatpush1.xpose.msra.mxu0 0.0
    %948 = vmatprep.subr.mxu0 0.0
    %949 = vmatpush1.xpose.msra.mxu0 0.0
    %950 = vmatprep.subr.mxu0 0.0
    %951 = vmatpush1.xpose.msra.mxu0 0.0
    %952 = vmatprep.subr.mxu0 0.0
    %953 = vmatpush1.xpose.msra.mxu0 0.0
    %954 = vmatprep.subr.mxu0 0.0
    %955 = vmatpush1.xpose.msra.mxu0 0.0
    %956 = vmatprep.subr.mxu0 0.0
    %957 = vmatpush1.xpose.msra.mxu0 0.0
    %958 = vmatprep.subr.mxu0 0.0
    %959 = vmatpush1.xpose.msra.mxu0 0.0
    %960 = vmatprep.subr.mxu0 0.0
    %961 = vmatpush1.xpose.msra.mxu0 0.0
    %962 = vmatprep.subr.mxu0 0.0
    %963 = vmatpush1.xpose.msra.mxu0 0.0
    %964 = vmatprep.subr.mxu0 0.0
    %965 = vmatpush1.xpose.msra.mxu0 0.0
    %966 = vmatprep.subr.mxu0 0.0
    %967 = vmatpush1.xpose.msra.mxu0 0.0
    %968 = vmatprep.subr.mxu0 0.0
    %969 = vmatpush1.xpose.msra.mxu0 0.0
    %970 = vmatprep.subr.mxu0 0.0
    %971 = vmatpush1.xpose.msra.mxu0 0.0
    %972 = vmatprep.subr.mxu0 0.0
    %973 = vmatpush1.xpose.msra.mxu0 0.0
    %974 = vmatprep.subr.mxu0 0.0
    %975 = vmatpush1.xpose.msra.mxu0 0.0
    %976 = vmatprep.subr.mxu0 0.0
    %977 = vmatpush1.xpose.msra.mxu0 0.0
    %978 = vmatprep.subr.mxu0 0.0
    %979 = vmatpush1.xpose.msra.mxu0 0.0
    %980 = vmatprep.subr.mxu0 0.0
    %981 = vmatpush1.xpose.msra.mxu0 0.0
    %982 = vmatprep.subr.mxu0 0.0
    %983 = vmatpush1.xpose.msra.mxu0 0.0
    %984 = vmatprep.subr.mxu0 0.0
    %985 = vmatpush1.xpose.msra.mxu0 0.0
    %986 = vmatprep.subr.mxu0 0.0
    %987 = vmatpush1.xpose.msra.mxu0 0.0
    %988 = vmatprep.subr.mxu0 0.0
    %989 = vmatpush1.xpose.msra.mxu0 0.0
    %990 = vmatprep.subr.mxu0 0.0
    %991 = vmatpush1.xpose.msra.mxu0 0.0
    %992 = vmatprep.subr.mxu0 0.0
    %993 = vmatpush1.xpose.msra.mxu0 0.0
    %994 = vmatprep.subr.mxu0 0.0
    %995 = vmatpush1.xpose.msra.mxu0 0.0
    %996 = vmatprep.subr.mxu0 0.0
    %997 = vmatpush1.xpose.msra.mxu0 0.0
    %998 = vmatprep.subr.mxu0 0.0
    %999 = vmatpush1.xpose.msra.mxu0 0.0
    %1000 = vmatprep.subr.mxu0 0.0
    %1001 = vmatpush1.xpose.msra.mxu0 0.0
    %1002 = vmatprep.subr.mxu0 0.0
    %1003 = vmatpush1.xpose.msra.mxu0 0.0
    %1004 = vmatprep.mubr.f32.mxu0 0.0
    %1005 = vmatmul.mubr.f32.gmra.mrb[0].mxu0 %v932
    %v1006 = vpop.f32.mrb[0].mxu0
    %v1007 = vadd.f32 %v72, %v1006
    %v1008 = vpop.f32.mrb[0].mxu0
    %1009 = vmatprep.mubr.f32.mxu0 0.0
    %1010 = vmatmul.mubr.f32.gmra.mrb[0].mxu0 %v934
    %v1011 = vpop.f32.mrb[0].mxu0
    %v1012 = vadd.f32 %v73, %v1011
    %v1013 = vpop.f32.mrb[0].mxu0
    %1014 = vdwg.mxu0
    %v1015 = vsel %vm418, %v1007, -inf
    %1016 = vmax.xlane.f32.xlu0 %v1015
    %v1017 = vpop.xlane.xlu0 %1016
    %v1018 = vsel %vm418, %v1012, -inf
    %1019 = vmax.xlane.f32.xlu0 %v1018
    %v1020 = vpop.xlane.xlu0 %1019
    %v1021 = vsub.f32 %v1007, %v1017
    %v1022 = vsub.f32 %v1012, %v1020
    %v1023 = vmul.f32 %v1021, 1.442695
    %v1024 = vpow.pop %v1023
    %v1025 = vmul.f32 %v1022, 1.442695
    %v1026 = vpow.pop %v1025
    %v1027 = vsel %vm418, %v1024, 0.0
    %1028 = vadd.xlane.f32.xlu0 %v1027
    %v1029 = vpop.xlane.xlu0 %1028
    %v1030 = vsel %vm418, %v1026, 0.0
    %1031 = vadd.xlane.f32.xlu0 %v1030
    %v1032 = vpop.xlane.xlu0 %1031
    %v1033 = vrcp.pop %v1029
    %v1034 = vmul.f32 %v1024, %v1033
    %v1035 = vrcp.pop %v1032
    %v1036 = vmul.f32 %v1026, %v1035
    %1037 = vrot.lane.b32.xlu0 %v322, 104
    %v1038 = vpop.permute.xlu0 %1037
    %1039 = vrot.lane.b32.xlu0 %v327, 104
    %v1040 = vpop.permute.xlu0 %1039
    %v1044 = vsel %vm418, %v1034, 0
    %v1047 = vsel %vm418, %v1036, 0
    %1049 = vmatprep.subr.mxu0 0.0
    %1050 = vmatpush1.msra.mxu0 %v1038
    %1051 = vmatprep.subr.mxu0 0.0
    %1052 = vmatpush1.msra.mxu0 %v1040
    %1053 = vmatprep.subr.mxu0 0.0
    %1054 = vmatpush1.msra.mxu0 0.0
    %1055 = vmatprep.subr.mxu0 0.0
    %1056 = vmatpush1.msra.mxu0 0.0
    %1057 = vmatprep.subr.mxu0 0.0
    %1058 = vmatpush1.msra.mxu0 0.0
    %1059 = vmatprep.subr.mxu0 0.0
    %1060 = vmatpush1.msra.mxu0 0.0
    %1061 = vmatprep.subr.mxu0 0.0
    %1062 = vmatpush1.msra.mxu0 0.0
    %1063 = vmatprep.subr.mxu0 0.0
    %1064 = vmatpush1.msra.mxu0 0.0
    %1065 = vmatprep.subr.mxu0 0.0
    %1066 = vmatpush1.msra.mxu0 0.0
    %1067 = vmatprep.subr.mxu0 0.0
    %1068 = vmatpush1.msra.mxu0 0.0
    %1069 = vmatprep.subr.mxu0 0.0
    %1070 = vmatpush1.msra.mxu0 0.0
    %1071 = vmatprep.subr.mxu0 0.0
    %1072 = vmatpush1.msra.mxu0 0.0
    %1073 = vmatprep.subr.mxu0 0.0
    %1074 = vmatpush1.msra.mxu0 0.0
    %1075 = vmatprep.subr.mxu0 0.0
    %1076 = vmatpush1.msra.mxu0 0.0
    %1077 = vmatprep.subr.mxu0 0.0
    %1078 = vmatpush1.msra.mxu0 0.0
    %1079 = vmatprep.subr.mxu0 0.0
    %1080 = vmatpush1.msra.mxu0 0.0
    %1081 = vmatprep.subr.mxu0 0.0
    %1082 = vmatpush1.msra.mxu0 0.0
    %1083 = vmatprep.subr.mxu0 0.0
    %1084 = vmatpush1.msra.mxu0 0.0
    %1085 = vmatprep.subr.mxu0 0.0
    %1086 = vmatpush1.msra.mxu0 0.0
    %1087 = vmatprep.subr.mxu0 0.0
    %1088 = vmatpush1.msra.mxu0 0.0
    %1089 = vmatprep.subr.mxu0 0.0
    %1090 = vmatpush1.msra.mxu0 0.0
    %1091 = vmatprep.subr.mxu0 0.0
    %1092 = vmatpush1.msra.mxu0 0.0
    %1093 = vmatprep.subr.mxu0 0.0
    %1094 = vmatpush1.msra.mxu0 0.0
    %1095 = vmatprep.subr.mxu0 0.0
    %1096 = vmatpush1.msra.mxu0 0.0
    %1097 = vmatprep.subr.mxu0 0.0
    %1098 = vmatpush1.msra.mxu0 0.0
    %1099 = vmatprep.subr.mxu0 0.0
    %1100 = vmatpush1.msra.mxu0 0.0
    %1101 = vmatprep.subr.mxu0 0.0
    %1102 = vmatpush1.msra.mxu0 0.0
    %1103 = vmatprep.subr.mxu0 0.0
    %1104 = vmatpush1.msra.mxu0 0.0
    %1105 = vmatprep.subr.mxu0 0.0
    %1106 = vmatpush1.msra.mxu0 0.0
    %1107 = vmatprep.subr.mxu0 0.0
    %1108 = vmatpush1.msra.mxu0 0.0
    %1109 = vmatprep.subr.mxu0 0.0
    %1110 = vmatpush1.msra.mxu0 0.0
    %1111 = vmatprep.subr.mxu0 0.0
    %1112 = vmatpush1.msra.mxu0 0.0
    %1113 = vmatprep.mubr.f32.mxu0 0.0
    %1114 = vmatmul.mubr.f32.gmra.mrb[0].mxu0 %v1044
    %v1115 = vpop.f32.mrb[0].mxu0
    %v1116 = vadd.f32 0.0, %v1115
    %v1117 = vpop.f32.mrb[0].mxu0
    %1118 = vmatprep.mubr.f32.mxu0 0.0
    %1119 = vmatmul.mubr.f32.gmra.mrb[0].mxu0 %v1047
    %v1120 = vpop.f32.mrb[0].mxu0
    %v1121 = vadd.f32 0.0, %v1120
    %v1122 = vpop.f32.mrb[0].mxu0
    %1123 = vdwg.mxu0
    %1126 = vrot.lane.b32.xlu0 %v716, 8
    %v1127 = vpop.permute.xlu0 %1126
    %1128 = vrot.lane.b32.xlu0 %v721, 8
    %v1129 = vpop.permute.xlu0 %1128
    %1134 = vrot.lane.b32.xlu0 %v916, 16
    %v1135 = vpop.permute.xlu0 %1134
    %1136 = vrot.lane.b32.xlu0 %v921, 16
    %v1137 = vpop.permute.xlu0 %1136
    %1142 = vrot.lane.b32.xlu0 %v1116, 24
    %v1143 = vpop.permute.xlu0 %1142
    %1144 = vrot.lane.b32.xlu0 %v1121, 24
    %v1145 = vpop.permute.xlu0 %1144
    %v1148 = vsel %vm330, %v514, %v1127
    %v1149 = vsel %vm330, %v519, %v1129
    %v1150 = vsel %vm418, %v1148, %v1135
    %v1151 = vsel %vm418, %v1149, %v1137
    %vm1152 = vcmask 195584
    %v1153 = vsel %vm1152, %v1150, %v1143
    %v1154 = vsel %vm1152, %v1151, %v1145
    %v1155 = vlaneseq
    %v1156 = vshrl.u32 %v1155, 7
    %v1157 = vsub.s32 0, %v1156
    %v1158 = vrot.slane %v65, %v1157
    %v1160 = vsel %vm78, %v1153, 0
    %v1163 = vsel %vm78, %v1154, 0
    %1165 = vmatprep.subr.mxu0 0.0
    %1166 = vmatpush1.msra.mxu0 %v46
    %1167 = vmatprep.subr.mxu0 0.0
    %1168 = vmatpush1.msra.mxu0 %v47
    %1169 = vmatprep.subr.mxu0 0.0
    %1170 = vmatpush1.msra.mxu0 %v48
    %1171 = vmatprep.subr.mxu0 0.0
    %1172 = vmatpush1.msra.mxu0 %v49
    %1173 = vmatprep.subr.mxu0 0.0
    %1174 = vmatpush1.msra.mxu0 0.0
    %1175 = vmatprep.subr.mxu0 0.0
    %1176 = vmatpush1.msra.mxu0 0.0
    %1177 = vmatprep.subr.mxu0 0.0
    %1178 = vmatpush1.msra.mxu0 0.0
    %1179 = vmatprep.subr.mxu0 0.0
    %1180 = vmatpush1.msra.mxu0 0.0
    %1181 = vmatprep.subr.mxu0 0.0
    %1182 = vmatpush1.msra.mxu0 0.0
    %1183 = vmatprep.subr.mxu0 0.0
    %1184 = vmatpush1.msra.mxu0 0.0
    %1185 = vmatprep.subr.mxu0 0.0
    %1186 = vmatpush1.msra.mxu0 0.0
    %1187 = vmatprep.subr.mxu0 0.0
    %1188 = vmatpush1.msra.mxu0 0.0
    %1189 = vmatprep.subr.mxu0 0.0
    %1190 = vmatpush1.msra.mxu0 0.0
    %1191 = vmatprep.subr.mxu0 0.0
    %1192 = vmatpush1.msra.mxu0 0.0
    %1193 = vmatprep.subr.mxu0 0.0
    %1194 = vmatpush1.msra.mxu0 0.0
    %1195 = vmatprep.subr.mxu0 0.0
    %1196 = vmatpush1.msra.mxu0 0.0
    %1197 = vmatprep.subr.mxu0 0.0
    %1198 = vmatpush1.msra.mxu0 0.0
    %1199 = vmatprep.subr.mxu0 0.0
    %1200 = vmatpush1.msra.mxu0 0.0
    %1201 = vmatprep.subr.mxu0 0.0
    %1202 = vmatpush1.msra.mxu0 0.0
    %1203 = vmatprep.subr.mxu0 0.0
    %1204 = vmatpush1.msra.mxu0 0.0
    %1205 = vmatprep.subr.mxu0 0.0
    %1206 = vmatpush1.msra.mxu0 0.0
    %1207 = vmatprep.subr.mxu0 0.0
    %1208 = vmatpush1.msra.mxu0 0.0
    %1209 = vmatprep.subr.mxu0 0.0
    %1210 = vmatpush1.msra.mxu0 0.0
    %1211 = vmatprep.subr.mxu0 0.0
    %1212 = vmatpush1.msra.mxu0 0.0
    %1213 = vmatprep.subr.mxu0 0.0
    %1214 = vmatpush1.msra.mxu0 0.0
    %1215 = vmatprep.subr.mxu0 0.0
    %1216 = vmatpush1.msra.mxu0 0.0
    %1217 = vmatprep.subr.mxu0 0.0
    %1218 = vmatpush1.msra.mxu0 0.0
    %1219 = vmatprep.subr.mxu0 0.0
    %1220 = vmatpush1.msra.mxu0 0.0
    %1221 = vmatprep.subr.mxu0 0.0
    %1222 = vmatpush1.msra.mxu0 0.0
    %1223 = vmatprep.subr.mxu0 0.0
    %1224 = vmatpush1.msra.mxu0 0.0
    %1225 = vmatprep.subr.mxu0 0.0
    %1226 = vmatpush1.msra.mxu0 0.0
    %1227 = vmatprep.subr.mxu0 0.0
    %1228 = vmatpush1.msra.mxu0 0.0
    %1229 = vmatprep.mubr.f32.mxu0 0.0
    %1230 = vmatmul.mubr.f32.gmra.mrb[0].mxu0 %v1160
    %v1231 = vpop.f32.mrb[0].mxu0
    %v1232 = vadd.f32 %v1158, %v1231
    %v1233 = vpop.f32.mrb[0].mxu0
    %1234 = vmatprep.mubr.f32.mxu0 0.0
    %1235 = vmatmul.mubr.f32.gmra.mrb[0].mxu0 %v1163
    %v1236 = vpop.f32.mrb[0].mxu0
    %v1237 = vadd.f32 %v1158, %v1236
    %v1238 = vpop.f32.mrb[0].mxu0
    %1239 = vdwg.mxu0
    %v1240 = vadd.f32 %v26, %v1232
    %v1241 = vadd.f32 %v27, %v1237
    %v1242 = vsel %vm78, %v1240, 0.0
    %1243 = vadd.xlane.f32.xlu0 %v1242
    %v1244 = vpop.xlane.xlu0 %1243
    %v1245 = vsel %vm78, %v1241, 0.0
    %1246 = vadd.xlane.f32.xlu0 %v1245
    %v1247 = vpop.xlane.xlu0 %1246
    %v1248 = vrcp.pop 32.0
    %v1249 = vmul.f32 %v1244, %v1248
    %v1250 = vmul.f32 %v1247, %v1248
    %v1251 = vsub.f32 %v1240, %v1249
    %v1252 = vsub.f32 %v1241, %v1250
    %v1253 = vmul.f32 %v1251, %v1251
    %v1254 = vmul.f32 %v1252, %v1252
    %v1255 = vsel %vm78, %v1253, 0.0
    %1256 = vadd.xlane.f32.xlu0 %v1255
    %v1257 = vpop.xlane.xlu0 %1256
    %v1258 = vsel %vm78, %v1254, 0.0
    %1259 = vadd.xlane.f32.xlu0 %v1258
    %v1260 = vpop.xlane.xlu0 %1259
    %v1261 = vmul.f32 %v1257, %v1248
    %v1262 = vmul.f32 %v1260, %v1248
    %v1263 = vadd.f32 %v1261, 1e-05
    %v1264 = vadd.f32 %v1262, 1e-05
    %v1265 = vrsqrt.pop %v1263
    %v1266 = vrsqrt.pop %v1264
    %v1267 = vmul.f32 %v1251, %v1265
    %v1268 = vmul.f32 %v1252, %v1266
    %v1269 = vlaneseq
    %v1270 = vshrl.u32 %v1269, 7
    %v1271 = vsub.s32 0, %v1270
    %v1272 = vrot.slane %v68, %v1271
    %v1273 = vmul.f32 %v1267, %v1272
    %v1274 = vmul.f32 %v1268, %v1272
    %v1275 = vlaneseq
    %v1276 = vshrl.u32 %v1275, 7
    %v1277 = vsub.s32 0, %v1276
    %v1278 = vrot.slane %v69, %v1277
    %v1279 = vadd.f32 %v1273, %v1278
    %v1280 = vadd.f32 %v1274, %v1278
    %v1281 = vlaneseq
    %v1282 = vshrl.u32 %v1281, 7
    %v1283 = vsub.s32 0, %v1282
    %v1284 = vrot.slane %v66, %v1283
    %v1286 = vsel %vm78, %v1279, 0
    %v1289 = vsel %vm78, %v1280, 0
    %1291 = vmatprep.subr.mxu0 0.0
    %1292 = vmatpush1.msra.mxu0 %v50
    %1293 = vmatprep.subr.mxu0 0.0
    %1294 = vmatpush1.msra.mxu0 %v51
    %1295 = vmatprep.subr.mxu0 0.0
    %1296 = vmatpush1.msra.mxu0 %v52
    %1297 = vmatprep.subr.mxu0 0.0
    %1298 = vmatpush1.msra.mxu0 %v53
    %1299 = vmatprep.subr.mxu0 0.0
    %1300 = vmatpush1.msra.mxu0 0.0
    %1301 = vmatprep.subr.mxu0 0.0
    %1302 = vmatpush1.msra.mxu0 0.0
    %1303 = vmatprep.subr.mxu0 0.0
    %1304 = vmatpush1.msra.mxu0 0.0
    %1305 = vmatprep.subr.mxu0 0.0
    %1306 = vmatpush1.msra.mxu0 0.0
    %1307 = vmatprep.subr.mxu0 0.0
    %1308 = vmatpush1.msra.mxu0 0.0
    %1309 = vmatprep.subr.mxu0 0.0
    %1310 = vmatpush1.msra.mxu0 0.0
    %1311 = vmatprep.subr.mxu0 0.0
    %1312 = vmatpush1.msra.mxu0 0.0
    %1313 = vmatprep.subr.mxu0 0.0
    %1314 = vmatpush1.msra.mxu0 0.0
    %1315 = vmatprep.subr.mxu0 0.0
    %1316 = vmatpush1.msra.mxu0 0.0
    %1317 = vmatprep.subr.mxu0 0.0
    %1318 = vmatpush1.msra.mxu0 0.0
    %1319 = vmatprep.subr.mxu0 0.0
    %1320 = vmatpush1.msra.mxu0 0.0
    %1321 = vmatprep.subr.mxu0 0.0
    %1322 = vmatpush1.msra.mxu0 0.0
    %1323 = vmatprep.subr.mxu0 0.0
    %1324 = vmatpush1.msra.mxu0 0.0
    %1325 = vmatprep.subr.mxu0 0.0
    %1326 = vmatpush1.msra.mxu0 0.0
    %1327 = vmatprep.subr.mxu0 0.0
    %1328 = vmatpush1.msra.mxu0 0.0
    %1329 = vmatprep.subr.mxu0 0.0
    %1330 = vmatpush1.msra.mxu0 0.0
    %1331 = vmatprep.subr.mxu0 0.0
    %1332 = vmatpush1.msra.mxu0 0.0
    %1333 = vmatprep.subr.mxu0 0.0
    %1334 = vmatpush1.msra.mxu0 0.0
    %1335 = vmatprep.subr.mxu0 0.0
    %1336 = vmatpush1.msra.mxu0 0.0
    %1337 = vmatprep.subr.mxu0 0.0
    %1338 = vmatpush1.msra.mxu0 0.0
    %1339 = vmatprep.subr.mxu0 0.0
    %1340 = vmatpush1.msra.mxu0 0.0
    %1341 = vmatprep.subr.mxu0 0.0
    %1342 = vmatpush1.msra.mxu0 0.0
    %1343 = vmatprep.subr.mxu0 0.0
    %1344 = vmatpush1.msra.mxu0 0.0
    %1345 = vmatprep.subr.mxu0 0.0
    %1346 = vmatpush1.msra.mxu0 0.0
    %1347 = vmatprep.subr.mxu0 0.0
    %1348 = vmatpush1.msra.mxu0 0.0
    %1349 = vmatprep.subr.mxu0 0.0
    %1350 = vmatpush1.msra.mxu0 0.0
    %1351 = vmatprep.subr.mxu0 0.0
    %1352 = vmatpush1.msra.mxu0 0.0
    %1353 = vmatprep.subr.mxu0 0.0
    %1354 = vmatpush1.msra.mxu0 0.0
    %1355 = vmatprep.mubr.f32.mxu0 0.0
    %1356 = vmatmul.mubr.f32.gmra.mrb[0].mxu0 %v1286
    %v1357 = vpop.f32.mrb[0].mxu0
    %v1358 = vadd.f32 %v1284, %v1357
    %v1359 = vpop.f32.mrb[0].mxu0
    %1360 = vmatprep.mubr.f32.mxu0 0.0
    %1361 = vmatmul.mubr.f32.gmra.mrb[0].mxu0 %v1289
    %v1362 = vpop.f32.mrb[0].mxu0
    %v1363 = vadd.f32 %v1284, %v1362
    %v1364 = vpop.f32.mrb[0].mxu0
    %1365 = vdwg.mxu0
    %v1366 = vmax.f32 %v1358, 0.0
    %v1367 = vmax.f32 %v1363, 0.0
    %v1368 = vlaneseq
    %v1369 = vshrl.u32 %v1368, 7
    %v1370 = vsub.s32 0, %v1369
    %v1371 = vrot.slane %v67, %v1370
    %vm1372 = vcmask 523264
    %v1374 = vsel %vm1372, %v1366, 0
    %v1377 = vsel %vm1372, %v1367, 0
    %1379 = vmatprep.subr.mxu0 0.0
    %1380 = vmatpush1.msra.mxu0 %v54
    %1381 = vmatprep.subr.mxu0 0.0
    %1382 = vmatpush1.msra.mxu0 %v55
    %1383 = vmatprep.subr.mxu0 0.0
    %1384 = vmatpush1.msra.mxu0 %v56
    %1385 = vmatprep.subr.mxu0 0.0
    %1386 = vmatpush1.msra.mxu0 %v57
    %1387 = vmatprep.subr.mxu0 0.0
    %1388 = vmatpush1.msra.mxu0 %v58
    %1389 = vmatprep.subr.mxu0 0.0
    %1390 = vmatpush1.msra.mxu0 %v59
    %1391 = vmatprep.subr.mxu0 0.0
    %1392 = vmatpush1.msra.mxu0 %v60
    %1393 = vmatprep.subr.mxu0 0.0
    %1394 = vmatpush1.msra.mxu0 %v61
    %1395 = vmatprep.subr.mxu0 0.0
    %1396 = vmatpush1.msra.mxu0 0.0
    %1397 = vmatprep.subr.mxu0 0.0
    %1398 = vmatpush1.msra.mxu0 0.0
    %1399 = vmatprep.subr.mxu0 0.0
    %1400 = vmatpush1.msra.mxu0 0.0
    %1401 = vmatprep.subr.mxu0 0.0
    %1402 = vmatpush1.msra.mxu0 0.0
    %1403 = vmatprep.subr.mxu0 0.0
    %1404 = vmatpush1.msra.mxu0 0.0
    %1405 = vmatprep.subr.mxu0 0.0
    %1406 = vmatpush1.msra.mxu0 0.0
    %1407 = vmatprep.subr.mxu0 0.0
    %1408 = vmatpush1.msra.mxu0 0.0
    %1409 = vmatprep.subr.mxu0 0.0
    %1410 = vmatpush1.msra.mxu0 0.0
    %1411 = vmatprep.subr.mxu0 0.0
    %1412 = vmatpush1.msra.mxu0 0.0
    %1413 = vmatprep.subr.mxu0 0.0
    %1414 = vmatpush1.msra.mxu0 0.0
    %1415 = vmatprep.subr.mxu0 0.0
    %1416 = vmatpush1.msra.mxu0 0.0
    %1417 = vmatprep.subr.mxu0 0.0
    %1418 = vmatpush1.msra.mxu0 0.0
    %1419 = vmatprep.subr.mxu0 0.0
    %1420 = vmatpush1.msra.mxu0 0.0
    %1421 = vmatprep.subr.mxu0 0.0
    %1422 = vmatpush1.msra.mxu0 0.0
    %1423 = vmatprep.subr.mxu0 0.0
    %1424 = vmatpush1.msra.mxu0 0.0
    %1425 = vmatprep.subr.mxu0 0.0
    %1426 = vmatpush1.msra.mxu0 0.0
    %1427 = vmatprep.subr.mxu0 0.0
    %1428 = vmatpush1.msra.mxu0 0.0
    %1429 = vmatprep.subr.mxu0 0.0
    %1430 = vmatpush1.msra.mxu0 0.0
    %1431 = vmatprep.subr.mxu0 0.0
    %1432 = vmatpush1.msra.mxu0 0.0
    %1433 = vmatprep.subr.mxu0 0.0
    %1434 = vmatpush1.msra.mxu0 0.0
    %1435 = vmatprep.subr.mxu0 0.0
    %1436 = vmatpush1.msra.mxu0 0.0
    %1437 = vmatprep.subr.mxu0 0.0
    %1438 = vmatpush1.msra.mxu0 0.0
    %1439 = vmatprep.subr.mxu0 0.0
    %1440 = vmatpush1.msra.mxu0 0.0
    %1441 = vmatprep.subr.mxu0 0.0
    %1442 = vmatpush1.msra.mxu0 0.0
    %1443 = vmatprep.mubr.f32.mxu0 0.0
    %1444 = vmatmul.mubr.f32.gmra.mrb[0].mxu0 %v1374
    %v1445 = vpop.f32.mrb[0].mxu0
    %v1446 = vadd.f32 %v1371, %v1445
    %v1447 = vpop.f32.mrb[0].mxu0
    %1448 = vmatprep.mubr.f32.mxu0 0.0
    %1449 = vmatmul.mubr.f32.gmra.mrb[0].mxu0 %v1377
    %v1450 = vpop.f32.mrb[0].mxu0
    %v1451 = vadd.f32 %v1371, %v1450
    %v1452 = vpop.f32.mrb[0].mxu0
    %1453 = vdwg.mxu0
    %v1454 = vadd.f32 %v1279, %v1446
    %v1455 = vadd.f32 %v1280, %v1451
    %v1456 = vsel %vm78, %v1454, 0.0
    %1457 = vadd.xlane.f32.xlu0 %v1456
    %v1458 = vpop.xlane.xlu0 %1457
    %v1459 = vsel %vm78, %v1455, 0.0
    %1460 = vadd.xlane.f32.xlu0 %v1459
    %v1461 = vpop.xlane.xlu0 %1460
    %v1462 = vmul.f32 %v1458, %v1248
    %v1463 = vmul.f32 %v1461, %v1248
    %v1464 = vsub.f32 %v1454, %v1462
    %v1465 = vsub.f32 %v1455, %v1463
    %v1466 = vmul.f32 %v1464, %v1464
    %v1467 = vmul.f32 %v1465, %v1465
    %v1468 = vsel %vm78, %v1466, 0.0
    %1469 = vadd.xlane.f32.xlu0 %v1468
    %v1470 = vpop.xlane.xlu0 %1469
    %v1471 = vsel %vm78, %v1467, 0.0
    %1472 = vadd.xlane.f32.xlu0 %v1471
    %v1473 = vpop.xlane.xlu0 %1472
    %v1474 = vmul.f32 %v1470, %v1248
    %v1475 = vmul.f32 %v1473, %v1248
    %v1476 = vadd.f32 %v1474, 1e-05
    %v1477 = vadd.f32 %v1475, 1e-05
    %v1478 = vrsqrt.pop %v1476
    %v1479 = vrsqrt.pop %v1477
    %v1480 = vmul.f32 %v1464, %v1478
    %v1481 = vmul.f32 %v1465, %v1479
    %v1482 = vlaneseq
    %v1483 = vshrl.u32 %v1482, 7
    %v1484 = vsub.s32 0, %v1483
    %v1485 = vrot.slane %v70, %v1484
    %v1486 = vmul.f32 %v1480, %v1485
    %v1487 = vmul.f32 %v1481, %v1485
    %v1488 = vlaneseq
    %v1489 = vshrl.u32 %v1488, 7
    %v1490 = vsub.s32 0, %v1489
    %v1491 = vrot.slane %v71, %v1490
    %v1492 = vadd.f32 %v1486, %v1491
    %v1493 = vadd.f32 %v1487, %v1491
    %1494 = vst.msk [vmem:[#allocation5] sm:$0xff] %vm78, %v1492
    %1495 = vst.msk [vmem:[#allocation5 + $0x8] sm:$0xff] %vm78, %v1493
    // Predicated region
    $region14: #{crossformer_forward.1} parent=1 // pred_check
      _
    $region15: #{crossformer_forward.1} parent=1 // pred_check_branch
      %1497 = sbr.rel (0) target = $region17
    $region16: #{crossformer_forward.1} parent=1 // pred_region
      %s1499 = ssub.s32 256, 256
      %1500 = vsyncadd [#allocation4], %s1499
      %s1501 = sshll.u32 [#allocation5], 4
      %s1502 = int_to_ptr.vmem [resolvable:$true] %s1501
      %1507 = dma.vmem_to_hbm [thread:$0]  %s1502, 256, %s2, [#allocation4], 128, 128, 8
    $region17: #{crossformer_forward.1} parent=1 // pred_fallthru
      _
    // Predicated region
    $region18: #{crossformer_forward.1} parent=1 // pred_check
      _
    $region19: #{crossformer_forward.1} parent=1 // pred_check_branch
      %1509 = sbr.rel (0) target = $region21
    $region20: #{crossformer_forward.1} parent=1 // pred_region
      %1510 = dma.done [#allocation4], 256
    $region21: #{crossformer_forward.1} parent=1 // pred_fallthru
      _
    %1511 = vsyncpa [#allocation3], 1
    %1512 = vsyncpa [#allocation4], 1

</llo_original>
